<compile_context>
chip_gen: v5e
topology: v5e:2x2
jax: 0.10.0
libtpu: 0.0.40
codegen_flags: <defaults>
</compile_context>

<pallas_src>
import functools
import math

import jax
import jax.numpy as jnp
from jax.experimental import pallas as pl
from jax.experimental.pallas import tpu as pltpu


# Above the scoped default on v5e (16 MiB) / v6e (32 MiB), within v7x's 64 MiB physical VMEM.
_VMEM_LIMIT_BYTES = 48 * 1024 * 1024


def _round_up(x: int, m: int) -> int:
    return ((x + m - 1) // m) * m


def _pick_tile(dim: int, cands=(512, 256, 128)) -> int:
    """Largest tile in `cands` dividing `dim` (dim is a multiple of 128 by construction)."""
    for c in cands:
        if dim % c == 0:
            return c
    return dim


def _pick_batch_tile(b_pad: int) -> int:
    """Multiple of 8 dividing b_pad; >=2 tiles whenever b_pad >= 16 (v7x megacore sharding)."""
    if b_pad < 16:
        return b_pad
    for c in (128, 64, 32, 16, 8):
        if c <= b_pad // 2 and b_pad % c == 0:
            return c
    return b_pad


# ---------------------------------------------------------------------------
# Kernel A: batched matmul + bias   out = A @ W + b
#   Used for (1) the hoisted input projection xW and (2) the output/vocab projection.
#   Grid tiled (rows, cols) with adaptive tiles up to 512x512; full K resident per tile.
# ---------------------------------------------------------------------------
def _matmul_bias_kernel(a_ref, w_ref, b_ref, o_ref):
    o_ref[...] = (jnp.dot(a_ref[...], w_ref[...], preferred_element_type=jnp.float32)
                  + b_ref[...]).astype(o_ref.dtype)


def _matmul_bias(a, w, b, out_dtype=jnp.float32):
    m, k = a.shape
    _, n = w.shape
    tm, tn = _pick_tile(m), _pick_tile(n)
    grid = (m // tm, n // tn)
    return pl.pallas_call(
        _matmul_bias_kernel,
        out_shape=jax.ShapeDtypeStruct((m, n), out_dtype),
        grid=grid,
        in_specs=[
            pl.BlockSpec((tm, k), lambda i, j: (i, 0)),   # row tile, full K
            pl.BlockSpec((k, tn), lambda i, j: (0, j)),   # (K, col-tile) weight slab
            pl.BlockSpec((1, tn), lambda i, j: (0, j)),   # bias tile
        ],
        out_specs=pl.BlockSpec((tm, tn), lambda i, j: (i, j)),
        compiler_params=pltpu.CompilerParams(
            dimension_semantics=("parallel", "parallel"),
            vmem_limit_bytes=_VMEM_LIMIT_BYTES),
    )(a, w, b)


# ---------------------------------------------------------------------------
# Kernel B: sequential RNN recurrence over time chunks (batch-major).
#   per chunk (statically unrolled over `time_chunk` steps):
#     h_t   = tanh(h_{t-1} @ W_hh^T + xw_t)            # xw already contains x@W_ih^T + bias
#     out_t = (t < lengths[b]) ? h_t : 0               # pack/pad_packed masking
#   grid = (batch_tiles ["parallel"], time_chunks ["arbitrary"/serial]); the f32 hidden
#   state lives in VMEM scratch and persists across the serial time axis.
# ---------------------------------------------------------------------------
def _rnn_recurrence_kernel(xw_ref, len_ref, whh_ref, h_out_ref, h_state, *, time_chunk):
    c = pl.program_id(1)                      # time-chunk index (serial axis)

    @pl.when(c == 0)
    def _():
        h_state[...] = jnp.zeros_like(h_state)

    compute_dtype = whh_ref.dtype
    whh = whh_ref[...]                        # (H_pad, H_pad), whole-array VMEM resident
    lengths = len_ref[...]                    # (bt, 1) int32
    t0 = c * time_chunk

    h = h_state[...]                          # (bt, H_pad) f32 carry
    for i in range(time_chunk):               # static unroll -> static slices on the time dim
        pre = jnp.dot(h.astype(compute_dtype), whh,
                      preferred_element_type=jnp.float32) + xw_ref[:, i, :]
        h = jnp.tanh(pre)                     # f32 (EUP)
        valid = (t0 + i) < lengths            # (bt, 1) bool
        h_out_ref[:, i, :] = jnp.where(valid, h, 0.0).astype(h_out_ref.dtype)
    h_state[...] = h


def _rnn_recurrence(xw, lengths_col, whh_t, out_dtype, *, time_chunk, batch_tile):
    b_pad, t_pad, h_pad = xw.shape
    grid = (b_pad // batch_tile, t_pad // time_chunk)
    # Constant weight block: whole-array VMEM placement (no revolving double buffer).
    whole_vmem = pl.BlockSpec(memory_space=pltpu.MemorySpace.VMEM)
    # TODO(synk): for very large H / batch_tile on v7x (64 MiB VMEM) shrink time_chunk/batch_tile
    # so 2x(xw chunk) + 2x(h_out chunk) + W_hh + f32 h scratch stays within the limit.
    return pl.pallas_call(
        functools.partial(_rnn_recurrence_kernel, time_chunk=time_chunk),
        out_shape=jax.ShapeDtypeStruct((b_pad, t_pad, h_pad), out_dtype),
        grid=grid,
        in_specs=[
            pl.BlockSpec((batch_tile, time_chunk, h_pad), lambda b, c: (b, c, 0)),  # xw chunk
            pl.BlockSpec((batch_tile, 1), lambda b, c: (b, 0)),                     # lengths
            whole_vmem,                                                             # W_hh^T
        ],
        out_specs=pl.BlockSpec((batch_tile, time_chunk, h_pad), lambda b, c: (b, c, 0)),
        scratch_shapes=[pltpu.VMEM((batch_tile, h_pad), jnp.float32)],
        compiler_params=pltpu.CompilerParams(
            dimension_semantics=("parallel", "arbitrary"),
            vmem_limit_bytes=_VMEM_LIMIT_BYTES),
    )(xw, lengths_col, whh_t)


# ---------------------------------------------------------------------------
# Parameter construction (deterministic, mirrors __init__ shapes)
# ---------------------------------------------------------------------------
def init_params(key, vocab_size, embed_size, hidden_size, pad_id):
    k_emb, k_wih, k_whh, k_bih, k_bhh, k_wo, k_bo = jax.random.split(key, 7)
    bound = 1.0 / jnp.sqrt(hidden_size)

    embedding = jax.random.normal(k_emb, (vocab_size, embed_size), jnp.float32)
    embedding = embedding.at[pad_id].set(0.0)  # padding_idx row is zero

    return {
        "embedding": embedding,
        "w_ih": jax.random.uniform(k_wih, (hidden_size, embed_size), jnp.float32, -bound, bound),
        "w_hh": jax.random.uniform(k_whh, (hidden_size, hidden_size), jnp.float32, -bound, bound),
        "b_ih": jax.random.uniform(k_bih, (hidden_size,), jnp.float32, -bound, bound),
        "b_hh": jax.random.uniform(k_bhh, (hidden_size,), jnp.float32, -bound, bound),
        "w_out": jax.random.uniform(k_wo, (vocab_size, hidden_size), jnp.float32, -bound, bound),
        "b_out": jax.random.uniform(k_bo, (vocab_size,), jnp.float32, -bound, bound),
    }


# ---------------------------------------------------------------------------
# Forward pass (JAX glue + the Pallas kernels)
# ---------------------------------------------------------------------------
@functools.partial(jax.jit, static_argnames=("compute_dtype", "time_chunk"))
def _forward_padded(params, indices, lengths, compute_dtype, time_chunk):
    """Returns full-length (B, T, V) logits; time trimming is done by the caller."""
    emb = params["embedding"]
    v, e = emb.shape
    h = params["w_hh"].shape[0]
    b, t = indices.shape

    b_pad = _round_up(b, 8)       # sublane alignment
    e_pad = _round_up(e, 128)     # lane alignment
    h_pad = _round_up(h, 128)
    v_pad = _round_up(v, 128)
    # T padded to lcm(time_chunk, 16) so B_pad*T_pad is a multiple of 128 (no h_flat re-pad).
    t_mult = (time_chunk * 16) // math.gcd(time_chunk, 16)
    t_pad = _round_up(t, t_mult)

    batch_tile = _pick_batch_tile(b_pad)
    m = b_pad * t_pad             # multiple of 128 by construction

    # Embedding lookup (gather glue; padding_idx row is zero). Batch-major, no transpose.
    embeds = jnp.take(emb, indices, axis=0)                                  # (B, T, E) f32
    x = jnp.pad(embeds, ((0, b_pad - b), (0, t_pad - t), (0, e_pad - e))).astype(compute_dtype)

    # Padded, pre-transposed parameters: bf16 matmul operands, f32 biases.
    wih_t = jnp.pad(params["w_ih"].T, ((0, e_pad - e), (0, h_pad - h))).astype(compute_dtype)
    whh_t = jnp.pad(params["w_hh"].T, ((0, h_pad - h), (0, h_pad - h))).astype(compute_dtype)
    b_rnn = jnp.pad((params["b_ih"] + params["b_hh"]).astype(jnp.float32)[None, :],
                    ((0, 0), (0, h_pad - h)))
    wout_t = jnp.pad(params["w_out"].T, ((0, h_pad - h), (0, v_pad - v))).astype(compute_dtype)
    b_out = jnp.pad(params["b_out"].astype(jnp.float32)[None, :], ((0, 0), (0, v_pad - v)))

    # 1) input projection hoisted off the serial path: one big batched matmul (+ fused RNN bias).
    xw = _matmul_bias(x.reshape(m, e_pad), wih_t, b_rnn,
                      jnp.float32).reshape(b_pad, t_pad, h_pad)              # (B_pad, T_pad, H_pad) f32

    # Per-row lengths (padded batch rows get length 0 -> fully masked).
    lengths_col = jnp.zeros((b_pad, 1), jnp.int32).at[:b, 0].set(lengths.astype(jnp.int32))

    # 2) serial recurrence -> masked hidden states, batch-major (B_pad, T_pad, H_pad).
    h_all = _rnn_recurrence(xw, lengths_col, whh_t, compute_dtype,
                            time_chunk=time_chunk, batch_tile=batch_tile)

    # 3) output projection  (M, H) @ (H, V) + b  — no re-pad, no transpose of logits.
    logits = _matmul_bias(h_all.reshape(m, h_pad), wout_t, b_out,
                          jnp.float32).reshape(b_pad, t_pad, v_pad)
    return logits[:b, :t, :v]                                                # (B, T, V)


def language_model_forward(params, indices, lengths, *,
                           compute_dtype=jnp.bfloat16, time_chunk=16):
    logits = _forward_padded(params, indices, lengths,
                             compute_dtype=compute_dtype, time_chunk=time_chunk)
    # pad_packed_sequence trims the time axis to max(lengths) (host-side, like PyTorch).
    t_out = int(jax.device_get(jnp.max(lengths)))
    return logits[:, :t_out]


# Pure-JAX reference (same precision policy / same op structure) for correctness checking.
def language_model_reference(params, indices, lengths, *, compute_dtype=jnp.bfloat16):
    embeds = jnp.take(params["embedding"], indices, axis=0).astype(compute_dtype)  # (B, T, E)
    b, t, _ = embeds.shape
    h_size = params["w_hh"].shape[0]

    wih_t = params["w_ih"].T.astype(compute_dtype)
    whh_t = params["w_hh"].T.astype(compute_dtype)
    b_rnn = (params["b_ih"] + params["b_hh"]).astype(jnp.float32)
    wout_t = params["w_out"].T.astype(compute_dtype)
    b_out = params["b_out"].astype(jnp.float32)

    xw = jnp.einsum("bte,eh->bth", embeds, wih_t,
                    preferred_element_type=jnp.float32) + b_rnn                    # (B, T, H) f32

    def step(h, xw_t):
        h_new = jnp.tanh(jnp.dot(h.astype(compute_dtype), whh_t,
                                 preferred_element_type=jnp.float32) + xw_t)
        return h_new, h_new

    _, hs = jax.lax.scan(step, jnp.zeros((b, h_size), jnp.float32),
                         jnp.transpose(xw, (1, 0, 2)))                              # (T, B, H)
    outs = jnp.transpose(hs, (1, 0, 2))                                             # (B, T, H)
    mask = (jnp.arange(t)[None, :] < lengths[:, None])[..., None]
    outs = jnp.where(mask, outs, 0.0).astype(compute_dtype)
    logits = jnp.einsum("bth,hv->btv", outs, wout_t,
                        preferred_element_type=jnp.float32) + b_out
    t_out = int(jax.device_get(jnp.max(lengths)))
    return logits[:, :t_out]


if __name__ == "__main__":
    # Small synthetic config (stand-in for TextDataset)
    vocab_size = 64
    embed_size = 32
    hidden_size = 32
    pad_id = 0
    batch_size = 2
    seq_len = 8
    compute_dtype = jnp.bfloat16   # bf16 MXU operands, f32 accumulation + f32 hidden carry

    key = jax.random.PRNGKey(0)
    k_params, k_idx = jax.random.split(key)
    params = init_params(k_params, vocab_size, embed_size, hidden_size, pad_id)

    lengths = jnp.array([seq_len, 5], dtype=jnp.int32)
    indices = jax.random.randint(k_idx, (batch_size, seq_len), 1, vocab_size, dtype=jnp.int32)
    # zero-pad tokens past each sequence's length (as the dataset would)
    pad_mask = jnp.arange(seq_len)[None, :] < lengths[:, None]
    indices = jnp.where(pad_mask, indices, pad_id)

    logits = language_model_forward(params, indices, lengths,
                                    compute_dtype=compute_dtype, time_chunk=16)
    logits = jax.block_until_ready(logits)

    ref = language_model_reference(params, indices, lengths, compute_dtype=compute_dtype)
    t_out = int(jnp.max(lengths))
    assert logits.shape == (batch_size, t_out, vocab_size), logits.shape
    atol = 1e-2 if compute_dtype == jnp.bfloat16 else 1e-5
    max_err = float(jnp.max(jnp.abs(logits - ref)))
    assert max_err <= atol, max_err

    # TODO(synk): the autoregressive `inference()` sampling loop (Categorical sampling,
    # EOS stopping, temperature) is host-side generation logic and is not part of this
    # forward kernel.
    print("KERNEL_OK")
</pallas_src>

<mosaic_0001>
module attributes {stable_mosaic.version = 11 : i64} {
  func.func @_matmul_bias_kernel(%arg0: i32, %arg1: i32, %arg2: memref<128x128xbf16, #tpu.memory_space<vmem>>, %arg3: memref<128x128xbf16, #tpu.memory_space<vmem>>, %arg4: memref<1x128xf32, #tpu.memory_space<vmem>>, %arg5: memref<128x128xf32, #tpu.memory_space<vmem>>) attributes {dimension_semantics = [#tpu.dimension_semantics<parallel>, #tpu.dimension_semantics<parallel>], iteration_bounds = array<i64: 1, 1>, scalar_prefetch = 0 : i64, scratch_operands = 0 : i64, tpu.core_type = #tpu.core_type<tc>, window_params = [{transform_indices = @transform_0, window_bounds = array<i64: 128, 128>}, {transform_indices = @transform_1, window_bounds = array<i64: 128, 128>}, {transform_indices = @transform_2, window_bounds = array<i64: 1, 128>}, {transform_indices = @transform_3, window_bounds = array<i64: 128, 128>}]} {
    %c0 = arith.constant 0 : index
    %c0_0 = arith.constant 0 : index
    %0 = vector.load %arg2[%c0, %c0_0] : memref<128x128xbf16, #tpu.memory_space<vmem>>, vector<128x128xbf16>
    %c0_1 = arith.constant 0 : index
    %c0_2 = arith.constant 0 : index
    %1 = vector.load %arg3[%c0_1, %c0_2] : memref<128x128xbf16, #tpu.memory_space<vmem>>, vector<128x128xbf16>
    %cst = arith.constant dense<0.000000e+00> : vector<128x128xf32>
    %2 = tpu.matmul %0, %1, %cst {dimension_numbers = #tpu.dot_dimension_numbers<[1], [0], [0], [1], [0, 0, 1, 1], [], []>} : vector<128x128xbf16>, vector<128x128xbf16>, vector<128x128xf32> -> vector<128x128xf32>
    %c0_3 = arith.constant 0 : index
    %c0_4 = arith.constant 0 : index
    %3 = vector.load %arg4[%c0_3, %c0_4] : memref<1x128xf32, #tpu.memory_space<vmem>>, vector<1x128xf32>
    %4 = vector.broadcast %3 : vector<1x128xf32> to vector<128x128xf32>
    %5 = arith.addf %2, %4 : vector<128x128xf32>
    %c0_5 = arith.constant 0 : index
    %c0_6 = arith.constant 0 : index
    %6 = vector.load %arg5[%c0_5, %c0_6] : memref<128x128xf32, #tpu.memory_space<vmem>>, vector<128x128xf32>
    tpu.vector_store %arg5[%c0_5, %c0_6], %5 {strides = array<i32>} : memref<128x128xf32, #tpu.memory_space<vmem>>, vector<128x128xf32>,
    return
  }
  func.func @transform_0(%arg0: i32, %arg1: i32) -> (i32, i32) {
    %c0_i32 = arith.constant 0 : i32
    %c0_i32_0 = arith.constant 0 : i32
    return %arg0, %c0_i32 : i32, i32
  }
  func.func @transform_1(%arg0: i32, %arg1: i32) -> (i32, i32) {
    %c0_i32 = arith.constant 0 : i32
    %c0_i32_0 = arith.constant 0 : i32
    return %c0_i32, %arg1 : i32, i32
  }
  func.func @transform_2(%arg0: i32, %arg1: i32) -> (i32, i32) {
    %c0_i32 = arith.constant 0 : i32
    %c0_i32_0 = arith.constant 0 : i32
    return %c0_i32, %arg1 : i32, i32
  }
  func.func @transform_3(%arg0: i32, %arg1: i32) -> (i32, i32) {
    %c0_i32 = arith.constant 0 : i32
    return %arg0, %arg1 : i32, i32
  }
}

module attributes {stable_mosaic.version = 11 : i64} {
  func.func @_rnn_recurrence_kernel(%arg0: i32, %arg1: i32, %arg2: memref<8x16x128xf32, #tpu.memory_space<vmem>>, %arg3: memref<8x1xi32, #tpu.memory_space<vmem>>, %arg4: memref<128x128xbf16, #tpu.memory_space<vmem>>, %arg5: memref<8x16x128xbf16, #tpu.memory_space<vmem>>, %arg6: memref<8x128xf32, #tpu.memory_space<vmem>>) attributes {dimension_semantics = [#tpu.dimension_semantics<parallel>, #tpu.dimension_semantics<arbitrary>], iteration_bounds = array<i64: 1, 1>, scalar_prefetch = 0 : i64, scratch_operands = 1 : i64, tpu.core_type = #tpu.core_type<tc>, window_params = [{transform_indices = @transform_0, window_bounds = array<i64: 8, 16, 128>}, {transform_indices = @transform_1, window_bounds = array<i64: 8, 1>}, {pipeline_mode = #tpu.pipeline_mode<synchronous>, transform_indices = @transform_2, window_bounds = array<i64: 128, 128>}, {transform_indices = @transform_3, window_bounds = array<i64: 8, 16, 128>}]} {
    %c0_i32 = arith.constant 0 : i32
    %0 = arith.cmpi eq, %arg1, %c0_i32 : i32
    %1 = arith.extui %0 : i1 to i32
    %c0_i32_0 = arith.constant 0 : i32
    %2 = arith.cmpi ne, %1, %c0_i32_0 : i32
    scf.if %2 {
      %cst_121 = arith.constant 0.000000e+00 : f32
      %280 = vector.broadcast %cst_121 : f32 to vector<8x128xf32>
      %c0_122 = arith.constant 0 : index
      %c0_123 = arith.constant 0 : index
      %281 = vector.load %arg6[%c0_122, %c0_123] : memref<8x128xf32, #tpu.memory_space<vmem>>, vector<8x128xf32>
      tpu.vector_store %arg6[%c0_122, %c0_123], %280 {strides = array<i32>} : memref<8x128xf32, #tpu.memory_space<vmem>>, vector<8x128xf32>,
    } else {
    }
    %c0 = arith.constant 0 : index
    %c0_1 = arith.constant 0 : index
    %3 = vector.load %arg4[%c0, %c0_1] : memref<128x128xbf16, #tpu.memory_space<vmem>>, vector<128x128xbf16>
    %c0_2 = arith.constant 0 : index
    %c0_3 = arith.constant 0 : index
    %4 = vector.load %arg3[%c0_2, %c0_3] : memref<8x1xi32, #tpu.memory_space<vmem>>, vector<8x1xi32>
    %c16_i32 = arith.constant 16 : i32
    %5 = arith.muli %arg1, %c16_i32 : i32
    %c0_4 = arith.constant 0 : index
    %c0_5 = arith.constant 0 : index
    %6 = vector.load %arg6[%c0_4, %c0_5] : memref<8x128xf32, #tpu.memory_space<vmem>>, vector<8x128xf32>
    %7 = arith.truncf %6 : vector<8x128xf32> to vector<8x128xbf16>
    %cst = arith.constant dense<0.000000e+00> : vector<8x128xf32>
    %8 = tpu.matmul %7, %3, %cst {dimension_numbers = #tpu.dot_dimension_numbers<[1], [0], [0], [1], [0, 0, 1, 1], [], []>} : vector<8x128xbf16>, vector<128x128xbf16>, vector<8x128xf32> -> vector<8x128xf32>
    %c0_6 = arith.constant 0 : index
    %c0_7 = arith.constant 0 : index
    %c0_8 = arith.constant 0 : index
    %9 = vector.load %arg2[%c0_6, %c0_7, %c0_8] : memref<8x16x128xf32, #tpu.memory_space<vmem>>, vector<8x1x128xf32>
    %10 = vector.shape_cast %9 : vector<8x1x128xf32> to vector<8x128xf32>
    %11 = arith.addf %8, %10 : vector<8x128xf32>
    %12 = math.tanh %11 : vector<8x128xf32>
    %c0_i32_9 = arith.constant 0 : i32
    %13 = arith.addi %5, %c0_i32_9 : i32
    %14 = vector.broadcast %13 : i32 to vector<8x1xi32>
    %15 = arith.cmpi slt, %14, %4 : vector<8x1xi32>
    %cst_10 = arith.constant 0.000000e+00 : f32
    %16 = vector.shape_cast %15 : vector<8x1xi1> to vector<8x1xi1>
    %17 = vector.broadcast %16 : vector<8x1xi1> to vector<8x128xi1>
    %18 = vector.broadcast %cst_10 : f32 to vector<8x128xf32>
    %19 = arith.select %17, %12, %18 : vector<8x128xi1>, vector<8x128xf32>
    %20 = arith.truncf %19 : vector<8x128xf32> to vector<8x128xbf16>
    %c0_11 = arith.constant 0 : index
    %c0_12 = arith.constant 0 : index
    %c0_13 = arith.constant 0 : index
    %21 = vector.load %arg5[%c0_11, %c0_12, %c0_13] : memref<8x16x128xbf16, #tpu.memory_space<vmem>>, vector<8x1x128xbf16>
    %22 = vector.shape_cast %21 : vector<8x1x128xbf16> to vector<8x128xbf16>
    %23 = vector.shape_cast %20 : vector<8x128xbf16> to vector<8x1x128xbf16>
    tpu.vector_store %arg5[%c0_11, %c0_12, %c0_13], %23 {strides = array<i32>} : memref<8x16x128xbf16, #tpu.memory_space<vmem>>, vector<8x1x128xbf16>,
    %24 = arith.truncf %12 : vector<8x128xf32> to vector<8x128xbf16>
    %cst_14 = arith.constant dense<0.000000e+00> : vector<8x128xf32>
    %25 = tpu.matmul %24, %3, %cst_14 {dimension_numbers = #tpu.dot_dimension_numbers<[1], [0], [0], [1], [0, 0, 1, 1], [], []>} : vector<8x128xbf16>, vector<128x128xbf16>, vector<8x128xf32> -> vector<8x128xf32>
    %c0_15 = arith.constant 0 : index
    %c1 = arith.constant 1 : index
    %c0_16 = arith.constant 0 : index
    %26 = vector.load %arg2[%c0_15, %c1, %c0_16] : memref<8x16x128xf32, #tpu.memory_space<vmem>>, vector<8x1x128xf32>
    %27 = vector.shape_cast %26 : vector<8x1x128xf32> to vector<8x128xf32>
    %28 = arith.addf %25, %27 : vector<8x128xf32>
    %29 = math.tanh %28 : vector<8x128xf32>
    %c1_i32 = arith.constant 1 : i32
    %30 = arith.addi %5, %c1_i32 : i32
    %31 = vector.broadcast %30 : i32 to vector<8x1xi32>
    %32 = arith.cmpi slt, %31, %4 : vector<8x1xi32>
    %cst_17 = arith.constant 0.000000e+00 : f32
    %33 = vector.shape_cast %32 : vector<8x1xi1> to vector<8x1xi1>
    %34 = vector.broadcast %33 : vector<8x1xi1> to vector<8x128xi1>
    %35 = vector.broadcast %cst_17 : f32 to vector<8x128xf32>
    %36 = arith.select %34, %29, %35 : vector<8x128xi1>, vector<8x128xf32>
    %37 = arith.truncf %36 : vector<8x128xf32> to vector<8x128xbf16>
    %c0_18 = arith.constant 0 : index
    %c1_19 = arith.constant 1 : index
    %c0_20 = arith.constant 0 : index
    %38 = vector.load %arg5[%c0_18, %c1_19, %c0_20] : memref<8x16x128xbf16, #tpu.memory_space<vmem>>, vector<8x1x128xbf16>
    %39 = vector.shape_cast %38 : vector<8x1x128xbf16> to vector<8x128xbf16>
    %40 = vector.shape_cast %37 : vector<8x128xbf16> to vector<8x1x128xbf16>
    tpu.vector_store %arg5[%c0_18, %c1_19, %c0_20], %40 {strides = array<i32>} : memref<8x16x128xbf16, #tpu.memory_space<vmem>>, vector<8x1x128xbf16>,
    %41 = arith.truncf %29 : vector<8x128xf32> to vector<8x128xbf16>
    %cst_21 = arith.constant dense<0.000000e+00> : vector<8x128xf32>
    %42 = tpu.matmul %41, %3, %cst_21 {dimension_numbers = #tpu.dot_dimension_numbers<[1], [0], [0], [1], [0, 0, 1, 1], [], []>} : vector<8x128xbf16>, vector<128x128xbf16>, vector<8x128xf32> -> vector<8x128xf32>
    %c0_22 = arith.constant 0 : index
    %c2 = arith.constant 2 : index
    %c0_23 = arith.constant 0 : index
    %43 = vector.load %arg2[%c0_22, %c2, %c0_23] : memref<8x16x128xf32, #tpu.memory_space<vmem>>, vector<8x1x128xf32>
    %44 = vector.shape_cast %43 : vector<8x1x128xf32> to vector<8x128xf32>
    %45 = arith.addf %42, %44 : vector<8x128xf32>
    %46 = math.tanh %45 : vector<8x128xf32>
    %c2_i32 = arith.constant 2 : i32
    %47 = arith.addi %5, %c2_i32 : i32
    %48 = vector.broadcast %47 : i32 to vector<8x1xi32>
    %49 = arith.cmpi slt, %48, %4 : vector<8x1xi32>
    %cst_24 = arith.constant 0.000000e+00 : f32
    %50 = vector.shape_cast %49 : vector<8x1xi1> to vector<8x1xi1>
    %51 = vector.broadcast %50 : vector<8x1xi1> to vector<8x128xi1>
    %52 = vector.broadcast %cst_24 : f32 to vector<8x128xf32>
    %53 = arith.select %51, %46, %52 : vector<8x128xi1>, vector<8x128xf32>
    %54 = arith.truncf %53 : vector<8x128xf32> to vector<8x128xbf16>
    %c0_25 = arith.constant 0 : index
    %c2_26 = arith.constant 2 : index
    %c0_27 = arith.constant 0 : index
    %55 = vector.load %arg5[%c0_25, %c2_26, %c0_27] : memref<8x16x128xbf16, #tpu.memory_space<vmem>>, vector<8x1x128xbf16>
    %56 = vector.shape_cast %55 : vector<8x1x128xbf16> to vector<8x128xbf16>
    %57 = vector.shape_cast %54 : vector<8x128xbf16> to vector<8x1x128xbf16>
    tpu.vector_store %arg5[%c0_25, %c2_26, %c0_27], %57 {strides = array<i32>} : memref<8x16x128xbf16, #tpu.memory_space<vmem>>, vector<8x1x128xbf16>,
    %58 = arith.truncf %46 : vector<8x128xf32> to vector<8x128xbf16>
    %cst_28 = arith.constant dense<0.000000e+00> : vector<8x128xf32>
    %59 = tpu.matmul %58, %3, %cst_28 {dimension_numbers = #tpu.dot_dimension_numbers<[1], [0], [0], [1], [0, 0, 1, 1], [], []>} : vector<8x128xbf16>, vector<128x128xbf16>, vector<8x128xf32> -> vector<8x128xf32>
    %c0_29 = arith.constant 0 : index
    %c3 = arith.constant 3 : index
    %c0_30 = arith.constant 0 : index
    %60 = vector.load %arg2[%c0_29, %c3, %c0_30] : memref<8x16x128xf32, #tpu.memory_space<vmem>>, vector<8x1x128xf32>
    %61 = vector.shape_cast %60 : vector<8x1x128xf32> to vector<8x128xf32>
    %62 = arith.addf %59, %61 : vector<8x128xf32>
    %63 = math.tanh %62 : vector<8x128xf32>
    %c3_i32 = arith.constant 3 : i32
    %64 = arith.addi %5, %c3_i32 : i32
    %65 = vector.broadcast %64 : i32 to vector<8x1xi32>
    %66 = arith.cmpi slt, %65, %4 : vector<8x1xi32>
    %cst_31 = arith.constant 0.000000e+00 : f32
    %67 = vector.shape_cast %66 : vector<8x1xi1> to vector<8x1xi1>
    %68 = vector.broadcast %67 : vector<8x1xi1> to vector<8x128xi1>
    %69 = vector.broadcast %cst_31 : f32 to vector<8x128xf32>
    %70 = arith.select %68, %63, %69 : vector<8x128xi1>, vector<8x128xf32>
    %71 = arith.truncf %70 : vector<8x128xf32> to vector<8x128xbf16>
    %c0_32 = arith.constant 0 : index
    %c3_33 = arith.constant 3 : index
    %c0_34 = arith.constant 0 : index
    %72 = vector.load %arg5[%c0_32, %c3_33, %c0_34] : memref<8x16x128xbf16, #tpu.memory_space<vmem>>, vector<8x1x128xbf16>
    %73 = vector.shape_cast %72 : vector<8x1x128xbf16> to vector<8x128xbf16>
    %74 = vector.shape_cast %71 : vector<8x128xbf16> to vector<8x1x128xbf16>
    tpu.vector_store %arg5[%c0_32, %c3_33, %c0_34], %74 {strides = array<i32>} : memref<8x16x128xbf16, #tpu.memory_space<vmem>>, vector<8x1x128xbf16>,
    %75 = arith.truncf %63 : vector<8x128xf32> to vector<8x128xbf16>
    %cst_35 = arith.constant dense<0.000000e+00> : vector<8x128xf32>
    %76 = tpu.matmul %75, %3, %cst_35 {dimension_numbers = #tpu.dot_dimension_numbers<[1], [0], [0], [1], [0, 0, 1, 1], [], []>} : vector<8x128xbf16>, vector<128x128xbf16>, vector<8x128xf32> -> vector<8x128xf32>
    %c0_36 = arith.constant 0 : index
    %c4 = arith.constant 4 : index
    %c0_37 = arith.constant 0 : index
    %77 = vector.load %arg2[%c0_36, %c4, %c0_37] : memref<8x16x128xf32, #tpu.memory_space<vmem>>, vector<8x1x128xf32>
    %78 = vector.shape_cast %77 : vector<8x1x128xf32> to vector<8x128xf32>
    %79 = arith.addf %76, %78 : vector<8x128xf32>
    %80 = math.tanh %79 : vector<8x128xf32>
    %c4_i32 = arith.constant 4 : i32
    %81 = arith.addi %5, %c4_i32 : i32
    %82 = vector.broadcast %81 : i32 to vector<8x1xi32>
    %83 = arith.cmpi slt, %82, %4 : vector<8x1xi32>
    %cst_38 = arith.constant 0.000000e+00 : f32
    %84 = vector.shape_cast %83 : vector<8x1xi1> to vector<8x1xi1>
    %85 = vector.broadcast %84 : vector<8x1xi1> to vector<8x128xi1>
    %86 = vector.broadcast %cst_38 : f32 to vector<8x128xf32>
    %87 = arith.select %85, %80, %86 : vector<8x128xi1>, vector<8x128xf32>
    %88 = arith.truncf %87 : vector<8x128xf32> to vector<8x128xbf16>
    %c0_39 = arith.constant 0 : index
    %c4_40 = arith.constant 4 : index
    %c0_41 = arith.constant 0 : index
    %89 = vector.load %arg5[%c0_39, %c4_40, %c0_41] : memref<8x16x128xbf16, #tpu.memory_space<vmem>>, vector<8x1x128xbf16>
    %90 = vector.shape_cast %89 : vector<8x1x128xbf16> to vector<8x128xbf16>
    %91 = vector.shape_cast %88 : vector<8x128xbf16> to vector<8x1x128xbf16>
    tpu.vector_store %arg5[%c0_39, %c4_40, %c0_41], %91 {strides = array<i32>} : memref<8x16x128xbf16, #tpu.memory_space<vmem>>, vector<8x1x128xbf16>,
    %92 = arith.truncf %80 : vector<8x128xf32> to vector<8x128xbf16>
    %cst_42 = arith.constant dense<0.000000e+00> : vector<8x128xf32>
    %93 = tpu.matmul %92, %3, %cst_42 {dimension_numbers = #tpu.dot_dimension_numbers<[1], [0], [0], [1], [0, 0, 1, 1], [], []>} : vector<8x128xbf16>, vector<128x128xbf16>, vector<8x128xf32> -> vector<8x128xf32>
    %c0_43 = arith.constant 0 : index
    %c5 = arith.constant 5 : index
    %c0_44 = arith.constant 0 : index
    %94 = vector.load %arg2[%c0_43, %c5, %c0_44] : memref<8x16x128xf32, #tpu.memory_space<vmem>>, vector<8x1x128xf32>
    %95 = vector.shape_cast %94 : vector<8x1x128xf32> to vector<8x128xf32>
    %96 = arith.addf %93, %95 : vector<8x128xf32>
    %97 = math.tanh %96 : vector<8x128xf32>
    %c5_i32 = arith.constant 5 : i32
    %98 = arith.addi %5, %c5_i32 : i32
    %99 = vector.broadcast %98 : i32 to vector<8x1xi32>
    %100 = arith.cmpi slt, %99, %4 : vector<8x1xi32>
    %cst_45 = arith.constant 0.000000e+00 : f32
    %101 = vector.shape_cast %100 : vector<8x1xi1> to vector<8x1xi1>
    %102 = vector.broadcast %101 : vector<8x1xi1> to vector<8x128xi1>
    %103 = vector.broadcast %cst_45 : f32 to vector<8x128xf32>
    %104 = arith.select %102, %97, %103 : vector<8x128xi1>, vector<8x128xf32>
    %105 = arith.truncf %104 : vector<8x128xf32> to vector<8x128xbf16>
    %c0_46 = arith.constant 0 : index
    %c5_47 = arith.constant 5 : index
    %c0_48 = arith.constant 0 : index
    %106 = vector.load %arg5[%c0_46, %c5_47, %c0_48] : memref<8x16x128xbf16, #tpu.memory_space<vmem>>, vector<8x1x128xbf16>
    %107 = vector.shape_cast %106 : vector<8x1x128xbf16> to vector<8x128xbf16>
    %108 = vector.shape_cast %105 : vector<8x128xbf16> to vector<8x1x128xbf16>
    tpu.vector_store %arg5[%c0_46, %c5_47, %c0_48], %108 {strides = array<i32>} : memref<8x16x128xbf16, #tpu.memory_space<vmem>>, vector<8x1x128xbf16>,
    %109 = arith.truncf %97 : vector<8x128xf32> to vector<8x128xbf16>
    %cst_49 = arith.constant dense<0.000000e+00> : vector<8x128xf32>
    %110 = tpu.matmul %109, %3, %cst_49 {dimension_numbers = #tpu.dot_dimension_numbers<[1], [0], [0], [1], [0, 0, 1, 1], [], []>} : vector<8x128xbf16>, vector<128x128xbf16>, vector<8x128xf32> -> vector<8x128xf32>
    %c0_50 = arith.constant 0 : index
    %c6 = arith.constant 6 : index
    %c0_51 = arith.constant 0 : index
    %111 = vector.load %arg2[%c0_50, %c6, %c0_51] : memref<8x16x128xf32, #tpu.memory_space<vmem>>, vector<8x1x128xf32>
    %112 = vector.shape_cast %111 : vector<8x1x128xf32> to vector<8x128xf32>
    %113 = arith.addf %110, %112 : vector<8x128xf32>
    %114 = math.tanh %113 : vector<8x128xf32>
    %c6_i32 = arith.constant 6 : i32
    %115 = arith.addi %5, %c6_i32 : i32
    %116 = vector.broadcast %115 : i32 to vector<8x1xi32>
    %117 = arith.cmpi slt, %116, %4 : vector<8x1xi32>
    %cst_52 = arith.constant 0.000000e+00 : f32
    %118 = vector.shape_cast %117 : vector<8x1xi1> to vector<8x1xi1>
    %119 = vector.broadcast %118 : vector<8x1xi1> to vector<8x128xi1>
    %120 = vector.broadcast %cst_52 : f32 to vector<8x128xf32>
    %121 = arith.select %119, %114, %120 : vector<8x128xi1>, vector<8x128xf32>
    %122 = arith.truncf %121 : vector<8x128xf32> to vector<8x128xbf16>
    %c0_53 = arith.constant 0 : index
    %c6_54 = arith.constant 6 : index
    %c0_55 = arith.constant 0 : index
    %123 = vector.load %arg5[%c0_53, %c6_54, %c0_55] : memref<8x16x128xbf16, #tpu.memory_space<vmem>>, vector<8x1x128xbf16>
    %124 = vector.shape_cast %123 : vector<8x1x128xbf16> to vector<8x128xbf16>
    %125 = vector.shape_cast %122 : vector<8x128xbf16> to vector<8x1x128xbf16>
    tpu.vector_store %arg5[%c0_53, %c6_54, %c0_55], %125 {strides = array<i32>} : memref<8x16x128xbf16, #tpu.memory_space<vmem>>, vector<8x1x128xbf16>,
    %126 = arith.truncf %114 : vector<8x128xf32> to vector<8x128xbf16>
    %cst_56 = arith.constant dense<0.000000e+00> : vector<8x128xf32>
    %127 = tpu.matmul %126, %3, %cst_56 {dimension_numbers = #tpu.dot_dimension_numbers<[1], [0], [0], [1], [0, 0, 1, 1], [], []>} : vector<8x128xbf16>, vector<128x128xbf16>, vector<8x128xf32> -> vector<8x128xf32>
    %c0_57 = arith.constant 0 : index
    %c7 = arith.constant 7 : index
    %c0_58 = arith.constant 0 : index
    %128 = vector.load %arg2[%c0_57, %c7, %c0_58] : memref<8x16x128xf32, #tpu.memory_space<vmem>>, vector<8x1x128xf32>
    %129 = vector.shape_cast %128 : vector<8x1x128xf32> to vector<8x128xf32>
    %130 = arith.addf %127, %129 : vector<8x128xf32>
    %131 = math.tanh %130 : vector<8x128xf32>
    %c7_i32 = arith.constant 7 : i32
    %132 = arith.addi %5, %c7_i32 : i32
    %133 = vector.broadcast %132 : i32 to vector<8x1xi32>
    %134 = arith.cmpi slt, %133, %4 : vector<8x1xi32>
    %cst_59 = arith.constant 0.000000e+00 : f32
    %135 = vector.shape_cast %134 : vector<8x1xi1> to vector<8x1xi1>
    %136 = vector.broadcast %135 : vector<8x1xi1> to vector<8x128xi1>
    %137 = vector.broadcast %cst_59 : f32 to vector<8x128xf32>
    %138 = arith.select %136, %131, %137 : vector<8x128xi1>, vector<8x128xf32>
    %139 = arith.truncf %138 : vector<8x128xf32> to vector<8x128xbf16>
    %c0_60 = arith.constant 0 : index
    %c7_61 = arith.constant 7 : index
    %c0_62 = arith.constant 0 : index
    %140 = vector.load %arg5[%c0_60, %c7_61, %c0_62] : memref<8x16x128xbf16, #tpu.memory_space<vmem>>, vector<8x1x128xbf16>
    %141 = vector.shape_cast %140 : vector<8x1x128xbf16> to vector<8x128xbf16>
    %142 = vector.shape_cast %139 : vector<8x128xbf16> to vector<8x1x128xbf16>
    tpu.vector_store %arg5[%c0_60, %c7_61, %c0_62], %142 {strides = array<i32>} : memref<8x16x128xbf16, #tpu.memory_space<vmem>>, vector<8x1x128xbf16>,
    %143 = arith.truncf %131 : vector<8x128xf32> to vector<8x128xbf16>
    %cst_63 = arith.constant dense<0.000000e+00> : vector<8x128xf32>
    %144 = tpu.matmul %143, %3, %cst_63 {dimension_numbers = #tpu.dot_dimension_numbers<[1], [0], [0], [1], [0, 0, 1, 1], [], []>} : vector<8x128xbf16>, vector<128x128xbf16>, vector<8x128xf32> -> vector<8x128xf32>
    %c0_64 = arith.constant 0 : index
    %c8 = arith.constant 8 : index
    %c0_65 = arith.constant 0 : index
    %145 = vector.load %arg2[%c0_64, %c8, %c0_65] : memref<8x16x128xf32, #tpu.memory_space<vmem>>, vector<8x1x128xf32>
    %146 = vector.shape_cast %145 : vector<8x1x128xf32> to vector<8x128xf32>
    %147 = arith.addf %144, %146 : vector<8x128xf32>
    %148 = math.tanh %147 : vector<8x128xf32>
    %c8_i32 = arith.constant 8 : i32
    %149 = arith.addi %5, %c8_i32 : i32
    %150 = vector.broadcast %149 : i32 to vector<8x1xi32>
    %151 = arith.cmpi slt, %150, %4 : vector<8x1xi32>
    %cst_66 = arith.constant 0.000000e+00 : f32
    %152 = vector.shape_cast %151 : vector<8x1xi1> to vector<8x1xi1>
    %153 = vector.broadcast %152 : vector<8x1xi1> to vector<8x128xi1>
    %154 = vector.broadcast %cst_66 : f32 to vector<8x128xf32>
    %155 = arith.select %153, %148, %154 : vector<8x128xi1>, vector<8x128xf32>
    %156 = arith.truncf %155 : vector<8x128xf32> to vector<8x128xbf16>
    %c0_67 = arith.constant 0 : index
    %c8_68 = arith.constant 8 : index
    %c0_69 = arith.constant 0 : index
    %157 = vector.load %arg5[%c0_67, %c8_68, %c0_69] : memref<8x16x128xbf16, #tpu.memory_space<vmem>>, vector<8x1x128xbf16>
    %158 = vector.shape_cast %157 : vector<8x1x128xbf16> to vector<8x128xbf16>
    %159 = vector.shape_cast %156 : vector<8x128xbf16> to vector<8x1x128xbf16>
    tpu.vector_store %arg5[%c0_67, %c8_68, %c0_69], %159 {strides = array<i32>} : memref<8x16x128xbf16, #tpu.memory_space<vmem>>, vector<8x1x128xbf16>,
    %160 = arith.truncf %148 : vector<8x128xf32> to vector<8x128xbf16>
    %cst_70 = arith.constant dense<0.000000e+00> : vector<8x128xf32>
    %161 = tpu.matmul %160, %3, %cst_70 {dimension_numbers = #tpu.dot_dimension_numbers<[1], [0], [0], [1], [0, 0, 1, 1], [], []>} : vector<8x128xbf16>, vector<128x128xbf16>, vector<8x128xf32> -> vector<8x128xf32>
    %c0_71 = arith.constant 0 : index
    %c9 = arith.constant 9 : index
    %c0_72 = arith.constant 0 : index
    %162 = vector.load %arg2[%c0_71, %c9, %c0_72] : memref<8x16x128xf32, #tpu.memory_space<vmem>>, vector<8x1x128xf32>
    %163 = vector.shape_cast %162 : vector<8x1x128xf32> to vector<8x128xf32>
    %164 = arith.addf %161, %163 : vector<8x128xf32>
    %165 = math.tanh %164 : vector<8x128xf32>
    %c9_i32 = arith.constant 9 : i32
    %166 = arith.addi %5, %c9_i32 : i32
    %167 = vector.broadcast %166 : i32 to vector<8x1xi32>
    %168 = arith.cmpi slt, %167, %4 : vector<8x1xi32>
    %cst_73 = arith.constant 0.000000e+00 : f32
    %169 = vector.shape_cast %168 : vector<8x1xi1> to vector<8x1xi1>
    %170 = vector.broadcast %169 : vector<8x1xi1> to vector<8x128xi1>
    %171 = vector.broadcast %cst_73 : f32 to vector<8x128xf32>
    %172 = arith.select %170, %165, %171 : vector<8x128xi1>, vector<8x128xf32>
    %173 = arith.truncf %172 : vector<8x128xf32> to vector<8x128xbf16>
    %c0_74 = arith.constant 0 : index
    %c9_75 = arith.constant 9 : index
    %c0_76 = arith.constant 0 : index
    %174 = vector.load %arg5[%c0_74, %c9_75, %c0_76] : memref<8x16x128xbf16, #tpu.memory_space<vmem>>, vector<8x1x128xbf16>
    %175 = vector.shape_cast %174 : vector<8x1x128xbf16> to vector<8x128xbf16>
    %176 = vector.shape_cast %173 : vector<8x128xbf16> to vector<8x1x128xbf16>
    tpu.vector_store %arg5[%c0_74, %c9_75, %c0_76], %176 {strides = array<i32>} : memref<8x16x128xbf16, #tpu.memory_space<vmem>>, vector<8x1x128xbf16>,
    %177 = arith.truncf %165 : vector<8x128xf32> to vector<8x128xbf16>
    %cst_77 = arith.constant dense<0.000000e+00> : vector<8x128xf32>
    %178 = tpu.matmul %177, %3, %cst_77 {dimension_numbers = #tpu.dot_dimension_numbers<[1], [0], [0], [1], [0, 0, 1, 1], [], []>} : vector<8x128xbf16>, vector<128x128xbf16>, vector<8x128xf32> -> vector<8x128xf32>
    %c0_78 = arith.constant 0 : index
    %c10 = arith.constant 10 : index
    %c0_79 = arith.constant 0 : index
    %179 = vector.load %arg2[%c0_78, %c10, %c0_79] : memref<8x16x128xf32, #tpu.memory_space<vmem>>, vector<8x1x128xf32>
    %180 = vector.shape_cast %179 : vector<8x1x128xf32> to vector<8x128xf32>
    %181 = arith.addf %178, %180 : vector<8x128xf32>
    %182 = math.tanh %181 : vector<8x128xf32>
    %c10_i32 = arith.constant 10 : i32
    %183 = arith.addi %5, %c10_i32 : i32
    %184 = vector.broadcast %183 : i32 to vector<8x1xi32>
    %185 = arith.cmpi slt, %184, %4 : vector<8x1xi32>
    %cst_80 = arith.constant 0.000000e+00 : f32
    %186 = vector.shape_cast %185 : vector<8x1xi1> to vector<8x1xi1>
    %187 = vector.broadcast %186 : vector<8x1xi1> to vector<8x128xi1>
    %188 = vector.broadcast %cst_80 : f32 to vector<8x128xf32>
    %189 = arith.select %187, %182, %188 : vector<8x128xi1>, vector<8x128xf32>
    %190 = arith.truncf %189 : vector<8x128xf32> to vector<8x128xbf16>
    %c0_81 = arith.constant 0 : index
    %c10_82 = arith.constant 10 : index
    %c0_83 = arith.constant 0 : index
    %191 = vector.load %arg5[%c0_81, %c10_82, %c0_83] : memref<8x16x128xbf16, #tpu.memory_space<vmem>>, vector<8x1x128xbf16>
    %192 = vector.shape_cast %191 : vector<8x1x128xbf16> to vector<8x128xbf16>
    %193 = vector.shape_cast %190 : vector<8x128xbf16> to vector<8x1x128xbf16>
    tpu.vector_store %arg5[%c0_81, %c10_82, %c0_83], %193 {strides = array<i32>} : memref<8x16x128xbf16, #tpu.memory_space<vmem>>, vector<8x1x128xbf16>,
    %194 = arith.truncf %182 : vector<8x128xf32> to vector<8x128xbf16>
    %cst_84 = arith.constant dense<0.000000e+00> : vector<8x128xf32>
    %195 = tpu.matmul %194, %3, %cst_84 {dimension_numbers = #tpu.dot_dimension_numbers<[1], [0], [0], [1], [0, 0, 1, 1], [], []>} : vector<8x128xbf16>, vector<128x128xbf16>, vector<8x128xf32> -> vector<8x128xf32>
    %c0_85 = arith.constant 0 : index
    %c11 = arith.constant 11 : index
    %c0_86 = arith.constant 0 : index
    %196 = vector.load %arg2[%c0_85, %c11, %c0_86] : memref<8x16x128xf32, #tpu.memory_space<vmem>>, vector<8x1x128xf32>
    %197 = vector.shape_cast %196 : vector<8x1x128xf32> to vector<8x128xf32>
    %198 = arith.addf %195, %197 : vector<8x128xf32>
    %199 = math.tanh %198 : vector<8x128xf32>
    %c11_i32 = arith.constant 11 : i32
    %200 = arith.addi %5, %c11_i32 : i32
    %201 = vector.broadcast %200 : i32 to vector<8x1xi32>
    %202 = arith.cmpi slt, %201, %4 : vector<8x1xi32>
    %cst_87 = arith.constant 0.000000e+00 : f32
    %203 = vector.shape_cast %202 : vector<8x1xi1> to vector<8x1xi1>
    %204 = vector.broadcast %203 : vector<8x1xi1> to vector<8x128xi1>
    %205 = vector.broadcast %cst_87 : f32 to vector<8x128xf32>
    %206 = arith.select %204, %199, %205 : vector<8x128xi1>, vector<8x128xf32>
    %207 = arith.truncf %206 : vector<8x128xf32> to vector<8x128xbf16>
    %c0_88 = arith.constant 0 : index
    %c11_89 = arith.constant 11 : index
    %c0_90 = arith.constant 0 : index
    %208 = vector.load %arg5[%c0_88, %c11_89, %c0_90] : memref<8x16x128xbf16, #tpu.memory_space<vmem>>, vector<8x1x128xbf16>
    %209 = vector.shape_cast %208 : vector<8x1x128xbf16> to vector<8x128xbf16>
    %210 = vector.shape_cast %207 : vector<8x128xbf16> to vector<8x1x128xbf16>
    tpu.vector_store %arg5[%c0_88, %c11_89, %c0_90], %210 {strides = array<i32>} : memref<8x16x128xbf16, #tpu.memory_space<vmem>>, vector<8x1x128xbf16>,
    %211 = arith.truncf %199 : vector<8x128xf32> to vector<8x128xbf16>
    %cst_91 = arith.constant dense<0.000000e+00> : vector<8x128xf32>
    %212 = tpu.matmul %211, %3, %cst_91 {dimension_numbers = #tpu.dot_dimension_numbers<[1], [0], [0], [1], [0, 0, 1, 1], [], []>} : vector<8x128xbf16>, vector<128x128xbf16>, vector<8x128xf32> -> vector<8x128xf32>
    %c0_92 = arith.constant 0 : index
    %c12 = arith.constant 12 : index
    %c0_93 = arith.constant 0 : index
    %213 = vector.load %arg2[%c0_92, %c12, %c0_93] : memref<8x16x128xf32, #tpu.memory_space<vmem>>, vector<8x1x128xf32>
    %214 = vector.shape_cast %213 : vector<8x1x128xf32> to vector<8x128xf32>
    %215 = arith.addf %212, %214 : vector<8x128xf32>
    %216 = math.tanh %215 : vector<8x128xf32>
    %c12_i32 = arith.constant 12 : i32
    %217 = arith.addi %5, %c12_i32 : i32
    %218 = vector.broadcast %217 : i32 to vector<8x1xi32>
    %219 = arith.cmpi slt, %218, %4 : vector<8x1xi32>
    %cst_94 = arith.constant 0.000000e+00 : f32
    %220 = vector.shape_cast %219 : vector<8x1xi1> to vector<8x1xi1>
    %221 = vector.broadcast %220 : vector<8x1xi1> to vector<8x128xi1>
    %222 = vector.broadcast %cst_94 : f32 to vector<8x128xf32>
    %223 = arith.select %221, %216, %222 : vector<8x128xi1>, vector<8x128xf32>
    %224 = arith.truncf %223 : vector<8x128xf32> to vector<8x128xbf16>
    %c0_95 = arith.constant 0 : index
    %c12_96 = arith.constant 12 : index
    %c0_97 = arith.constant 0 : index
    %225 = vector.load %arg5[%c0_95, %c12_96, %c0_97] : memref<8x16x128xbf16, #tpu.memory_space<vmem>>, vector<8x1x128xbf16>
    %226 = vector.shape_cast %225 : vector<8x1x128xbf16> to vector<8x128xbf16>
    %227 = vector.shape_cast %224 : vector<8x128xbf16> to vector<8x1x128xbf16>
    tpu.vector_store %arg5[%c0_95, %c12_96, %c0_97], %227 {strides = array<i32>} : memref<8x16x128xbf16, #tpu.memory_space<vmem>>, vector<8x1x128xbf16>,
    %228 = arith.truncf %216 : vector<8x128xf32> to vector<8x128xbf16>
    %cst_98 = arith.constant dense<0.000000e+00> : vector<8x128xf32>
    %229 = tpu.matmul %228, %3, %cst_98 {dimension_numbers = #tpu.dot_dimension_numbers<[1], [0], [0], [1], [0, 0, 1, 1], [], []>} : vector<8x128xbf16>, vector<128x128xbf16>, vector<8x128xf32> -> vector<8x128xf32>
    %c0_99 = arith.constant 0 : index
    %c13 = arith.constant 13 : index
    %c0_100 = arith.constant 0 : index
    %230 = vector.load %arg2[%c0_99, %c13, %c0_100] : memref<8x16x128xf32, #tpu.memory_space<vmem>>, vector<8x1x128xf32>
    %231 = vector.shape_cast %230 : vector<8x1x128xf32> to vector<8x128xf32>
    %232 = arith.addf %229, %231 : vector<8x128xf32>
    %233 = math.tanh %232 : vector<8x128xf32>
    %c13_i32 = arith.constant 13 : i32
    %234 = arith.addi %5, %c13_i32 : i32
    %235 = vector.broadcast %234 : i32 to vector<8x1xi32>
    %236 = arith.cmpi slt, %235, %4 : vector<8x1xi32>
    %cst_101 = arith.constant 0.000000e+00 : f32
    %237 = vector.shape_cast %236 : vector<8x1xi1> to vector<8x1xi1>
    %238 = vector.broadcast %237 : vector<8x1xi1> to vector<8x128xi1>
    %239 = vector.broadcast %cst_101 : f32 to vector<8x128xf32>
    %240 = arith.select %238, %233, %239 : vector<8x128xi1>, vector<8x128xf32>
    %241 = arith.truncf %240 : vector<8x128xf32> to vector<8x128xbf16>
    %c0_102 = arith.constant 0 : index
    %c13_103 = arith.constant 13 : index
    %c0_104 = arith.constant 0 : index
    %242 = vector.load %arg5[%c0_102, %c13_103, %c0_104] : memref<8x16x128xbf16, #tpu.memory_space<vmem>>, vector<8x1x128xbf16>
    %243 = vector.shape_cast %242 : vector<8x1x128xbf16> to vector<8x128xbf16>
    %244 = vector.shape_cast %241 : vector<8x128xbf16> to vector<8x1x128xbf16>
    tpu.vector_store %arg5[%c0_102, %c13_103, %c0_104], %244 {strides = array<i32>} : memref<8x16x128xbf16, #tpu.memory_space<vmem>>, vector<8x1x128xbf16>,
    %245 = arith.truncf %233 : vector<8x128xf32> to vector<8x128xbf16>
    %cst_105 = arith.constant dense<0.000000e+00> : vector<8x128xf32>
    %246 = tpu.matmul %245, %3, %cst_105 {dimension_numbers = #tpu.dot_dimension_numbers<[1], [0], [0], [1], [0, 0, 1, 1], [], []>} : vector<8x128xbf16>, vector<128x128xbf16>, vector<8x128xf32> -> vector<8x128xf32>
    %c0_106 = arith.constant 0 : index
    %c14 = arith.constant 14 : index
    %c0_107 = arith.constant 0 : index
    %247 = vector.load %arg2[%c0_106, %c14, %c0_107] : memref<8x16x128xf32, #tpu.memory_space<vmem>>, vector<8x1x128xf32>
    %248 = vector.shape_cast %247 : vector<8x1x128xf32> to vector<8x128xf32>
    %249 = arith.addf %246, %248 : vector<8x128xf32>
    %250 = math.tanh %249 : vector<8x128xf32>
    %c14_i32 = arith.constant 14 : i32
    %251 = arith.addi %5, %c14_i32 : i32
    %252 = vector.broadcast %251 : i32 to vector<8x1xi32>
    %253 = arith.cmpi slt, %252, %4 : vector<8x1xi32>
    %cst_108 = arith.constant 0.000000e+00 : f32
    %254 = vector.shape_cast %253 : vector<8x1xi1> to vector<8x1xi1>
    %255 = vector.broadcast %254 : vector<8x1xi1> to vector<8x128xi1>
    %256 = vector.broadcast %cst_108 : f32 to vector<8x128xf32>
    %257 = arith.select %255, %250, %256 : vector<8x128xi1>, vector<8x128xf32>
    %258 = arith.truncf %257 : vector<8x128xf32> to vector<8x128xbf16>
    %c0_109 = arith.constant 0 : index
    %c14_110 = arith.constant 14 : index
    %c0_111 = arith.constant 0 : index
    %259 = vector.load %arg5[%c0_109, %c14_110, %c0_111] : memref<8x16x128xbf16, #tpu.memory_space<vmem>>, vector<8x1x128xbf16>
    %260 = vector.shape_cast %259 : vector<8x1x128xbf16> to vector<8x128xbf16>
    %261 = vector.shape_cast %258 : vector<8x128xbf16> to vector<8x1x128xbf16>
    tpu.vector_store %arg5[%c0_109, %c14_110, %c0_111], %261 {strides = array<i32>} : memref<8x16x128xbf16, #tpu.memory_space<vmem>>, vector<8x1x128xbf16>,
    %262 = arith.truncf %250 : vector<8x128xf32> to vector<8x128xbf16>
    %cst_112 = arith.constant dense<0.000000e+00> : vector<8x128xf32>
    %263 = tpu.matmul %262, %3, %cst_112 {dimension_numbers = #tpu.dot_dimension_numbers<[1], [0], [0], [1], [0, 0, 1, 1], [], []>} : vector<8x128xbf16>, vector<128x128xbf16>, vector<8x128xf32> -> vector<8x128xf32>
    %c0_113 = arith.constant 0 : index
    %c15 = arith.constant 15 : index
    %c0_114 = arith.constant 0 : index
    %264 = vector.load %arg2[%c0_113, %c15, %c0_114] : memref<8x16x128xf32, #tpu.memory_space<vmem>>, vector<8x1x128xf32>
    %265 = vector.shape_cast %264 : vector<8x1x128xf32> to vector<8x128xf32>
    %266 = arith.addf %263, %265 : vector<8x128xf32>
    %267 = math.tanh %266 : vector<8x128xf32>
    %c15_i32 = arith.constant 15 : i32
    %268 = arith.addi %5, %c15_i32 : i32
    %269 = vector.broadcast %268 : i32 to vector<8x1xi32>
    %270 = arith.cmpi slt, %269, %4 : vector<8x1xi32>
    %cst_115 = arith.constant 0.000000e+00 : f32
    %271 = vector.shape_cast %270 : vector<8x1xi1> to vector<8x1xi1>
    %272 = vector.broadcast %271 : vector<8x1xi1> to vector<8x128xi1>
    %273 = vector.broadcast %cst_115 : f32 to vector<8x128xf32>
    %274 = arith.select %272, %267, %273 : vector<8x128xi1>, vector<8x128xf32>
    %275 = arith.truncf %274 : vector<8x128xf32> to vector<8x128xbf16>
    %c0_116 = arith.constant 0 : index
    %c15_117 = arith.constant 15 : index
    %c0_118 = arith.constant 0 : index
    %276 = vector.load %arg5[%c0_116, %c15_117, %c0_118] : memref<8x16x128xbf16, #tpu.memory_space<vmem>>, vector<8x1x128xbf16>
    %277 = vector.shape_cast %276 : vector<8x1x128xbf16> to vector<8x128xbf16>
    %278 = vector.shape_cast %275 : vector<8x128xbf16> to vector<8x1x128xbf16>
    tpu.vector_store %arg5[%c0_116, %c15_117, %c0_118], %278 {strides = array<i32>} : memref<8x16x128xbf16, #tpu.memory_space<vmem>>, vector<8x1x128xbf16>,
    %c0_119 = arith.constant 0 : index
    %c0_120 = arith.constant 0 : index
    %279 = vector.load %arg6[%c0_119, %c0_120] : memref<8x128xf32, #tpu.memory_space<vmem>>, vector<8x128xf32>
    tpu.vector_store %arg6[%c0_119, %c0_120], %267 {strides = array<i32>} : memref<8x128xf32, #tpu.memory_space<vmem>>, vector<8x128xf32>,
    return
  }
  func.func @transform_0(%arg0: i32, %arg1: i32) -> (i32, i32, i32) {
    %c0_i32 = arith.constant 0 : i32
    %c0_i32_0 = arith.constant 0 : i32
    return %arg0, %arg1, %c0_i32 : i32, i32, i32
  }
  func.func @transform_1(%arg0: i32, %arg1: i32) -> (i32, i32) {
    %c0_i32 = arith.constant 0 : i32
    %c0_i32_0 = arith.constant 0 : i32
    return %arg0, %c0_i32 : i32, i32
  }
  func.func @transform_2(%arg0: i32, %arg1: i32) -> (i32, i32) {
    %c0_i32 = arith.constant 0 : i32
    %c0_i32_0 = arith.constant 0 : i32
    %c0_i32_1 = arith.constant 0 : i32
    return %c0_i32, %c0_i32_0 : i32, i32
  }
  func.func @transform_3(%arg0: i32, %arg1: i32) -> (i32, i32, i32) {
    %c0_i32 = arith.constant 0 : i32
    %c0_i32_0 = arith.constant 0 : i32
    return %arg0, %arg1, %c0_i32 : i32, i32, i32
  }
}

</mosaic_0001>

<llo_original>
// kernel: _forward_padded.3
$region0: #{_forward_padded.3}
  #allocation0 [shape = 'u32[]', space=smem, size = 0x4, offset = 0x4, fixed_abs, tag = 'smem constant byte address 0x4 - core index']
  #allocation1 [shape = 'u32[72,128]{1,0:T(1,128)}', space=vmem, size = 0x9000, scoped, tag = 'internal scratch']
  %s0 = inlined_call_operand.vmem [shape: bf16[128,128], index: 0, kind: input, shape index: {}]
  %s1 = inlined_call_operand.vmem [shape: bf16[128,128], index: 1, kind: input, shape index: {}]
  %s2 = inlined_call_operand.vmem [shape: f32[1,128], index: 2, kind: input, shape index: {}]
  %s3 = inlined_call_operand.vmem [shape: f32[128,128], index: 3, kind: output, shape index: {}]
  %s4 = sld [smem:[#allocation0]]
  $region22: #{_forward_padded.3} parent=0
    _
  %s6 = ssub.s32 1, %s4
  %s7 = scalar_select 0, %s6, %s4
  // Predicated region
  $region2: #{_forward_padded.3} parent=0 // pred_check
    _
  $region3: #{_forward_padded.3} parent=0 // pred_check_branch
    %9 = sbr.rel (0) target = $region5
  $region4: #{_forward_padded.3} parent=0 // pred_region
    _
  $region5: #{_forward_padded.3} parent=0 // pred_fallthru
    _
  // Predicated region
  $region6: #{_forward_padded.3} parent=0 // pred_check
    _
  $region7: #{_forward_padded.3} parent=0 // pred_check_branch
    %11 = sbr.rel (0) target = $region9
  $region8: #{_forward_padded.3} parent=0 // pred_region
    _
  $region9: #{_forward_padded.3} parent=0 // pred_fallthru
    _
  // Predicated region
  $region10: #{_forward_padded.3} parent=0 // pred_check
    _
  $region11: #{_forward_padded.3} parent=0 // pred_check_branch
    %13 = sbr.rel (0) target = $region13
  $region12: #{_forward_padded.3} parent=0 // pred_region
    _
  $region13: #{_forward_padded.3} parent=0 // pred_fallthru
    _
  %v14 = vld [vmem:[%s0] sm:$0xf]
  %v15 = vld [vmem:[%s0 + $0x4] sm:$0xf]
  %v16 = vld [vmem:[%s0 + $0x8] sm:$0xf]
  %v17 = vld [vmem:[%s0 + $0xc] sm:$0xf]
  %v18 = vld [vmem:[%s0 + $0x10] sm:$0xf]
  %v19 = vld [vmem:[%s0 + $0x14] sm:$0xf]
  %v20 = vld [vmem:[%s0 + $0x18] sm:$0xf]
  %v21 = vld [vmem:[%s0 + $0x1c] sm:$0xf]
  %v22 = vld [vmem:[%s0 + $0x20] sm:$0xf]
  %v23 = vld [vmem:[%s0 + $0x24] sm:$0xf]
  %v24 = vld [vmem:[%s0 + $0x28] sm:$0xf]
  %v25 = vld [vmem:[%s0 + $0x2c] sm:$0xf]
  %v26 = vld [vmem:[%s0 + $0x30] sm:$0xf]
  %v27 = vld [vmem:[%s0 + $0x34] sm:$0xf]
  %v28 = vld [vmem:[%s0 + $0x38] sm:$0xf]
  %v29 = vld [vmem:[%s0 + $0x3c] sm:$0xf]
  %v30 = vld [vmem:[%s1] sm:$0xf]
  %v31 = vld [vmem:[%s1 + $0x4] sm:$0xf]
  %v32 = vld [vmem:[%s1 + $0x8] sm:$0xf]
  %v33 = vld [vmem:[%s1 + $0xc] sm:$0xf]
  %v34 = vld [vmem:[%s1 + $0x10] sm:$0xf]
  %v35 = vld [vmem:[%s1 + $0x14] sm:$0xf]
  %v36 = vld [vmem:[%s1 + $0x18] sm:$0xf]
  %v37 = vld [vmem:[%s1 + $0x1c] sm:$0xf]
  %v38 = vld [vmem:[%s1 + $0x20] sm:$0xf]
  %v39 = vld [vmem:[%s1 + $0x24] sm:$0xf]
  %v40 = vld [vmem:[%s1 + $0x28] sm:$0xf]
  %v41 = vld [vmem:[%s1 + $0x2c] sm:$0xf]
  %v42 = vld [vmem:[%s1 + $0x30] sm:$0xf]
  %v43 = vld [vmem:[%s1 + $0x34] sm:$0xf]
  %v44 = vld [vmem:[%s1 + $0x38] sm:$0xf]
  %v45 = vld [vmem:[%s1 + $0x3c] sm:$0xf]
  %v46 = vld [vmem:[%s2] sm:$0x1]
  %v48 = vperm.slane %v46, 0
  %v66 = vunpack.c.l.b16 %v14
  %v67 = vunpack.c.l.b16 %v15
  %v68 = vunpack.c.l.b16 %v16
  %v69 = vunpack.c.l.b16 %v17
  %v70 = vunpack.c.l.b16 %v18
  %v71 = vunpack.c.l.b16 %v19
  %v72 = vunpack.c.l.b16 %v20
  %v73 = vunpack.c.l.b16 %v21
  %v74 = vunpack.c.l.b16 %v22
  %v75 = vunpack.c.l.b16 %v23
  %v76 = vunpack.c.l.b16 %v24
  %v77 = vunpack.c.l.b16 %v25
  %v78 = vunpack.c.l.b16 %v26
  %v79 = vunpack.c.l.b16 %v27
  %v80 = vunpack.c.l.b16 %v28
  %v81 = vunpack.c.l.b16 %v29
  %v82 = vpack.c.b16 %v67, %v66
  %v83 = vpack.c.b16 %v69, %v68
  %v84 = vpack.c.b16 %v71, %v70
  %v85 = vpack.c.b16 %v73, %v72
  %v86 = vpack.c.b16 %v75, %v74
  %v87 = vpack.c.b16 %v77, %v76
  %v88 = vpack.c.b16 %v79, %v78
  %v89 = vpack.c.b16 %v81, %v80
  %v114 = vunpack.c.l.b16 %v30
  %v115 = vunpack.c.l.b16 %v31
  %v116 = vunpack.c.l.b16 %v32
  %v117 = vunpack.c.l.b16 %v33
  %v118 = vunpack.c.l.b16 %v34
  %v119 = vunpack.c.l.b16 %v35
  %v120 = vunpack.c.l.b16 %v36
  %v121 = vunpack.c.l.b16 %v37
  %v122 = vunpack.c.l.b16 %v38
  %v123 = vunpack.c.l.b16 %v39
  %v124 = vunpack.c.l.b16 %v40
  %v125 = vunpack.c.l.b16 %v41
  %v126 = vunpack.c.l.b16 %v42
  %v127 = vunpack.c.l.b16 %v43
  %v128 = vunpack.c.l.b16 %v44
  %v129 = vunpack.c.l.b16 %v45
  %v130 = vpack.c.b16 %v115, %v114
  %v131 = vpack.c.b16 %v117, %v116
  %v132 = vpack.c.b16 %v119, %v118
  %v133 = vpack.c.b16 %v121, %v120
  %v134 = vpack.c.b16 %v123, %v122
  %v135 = vpack.c.b16 %v125, %v124
  %v136 = vpack.c.b16 %v127, %v126
  %v137 = vpack.c.b16 %v129, %v128
  %146 = vmatpush.bf16.msra.mxu0 %v137
  %147 = vmatpush.bf16.msra.mxu0 %v136
  %148 = vmatpush.bf16.msra.mxu0 %v135
  %149 = vmatpush.bf16.msra.mxu0 %v134
  %150 = vmatpush.bf16.msra.mxu0 %v133
  %151 = vmatpush.bf16.msra.mxu0 %v132
  %152 = vmatpush.bf16.msra.mxu0 %v131
  %153 = vmatpush.bf16.msra.mxu0 %v130
  %154 = vmatmul.bf16.gmra.mxu0 %v82
  %v155 = vpop.f32.mrf.mxu0
  %v156 = vadd.f32 %v48, %v155
  %v157 = vpop.f32.mrf.mxu0
  %v158 = vadd.f32 %v48, %v157
  %159 = vmatmul.bf16.gmra.mxu0 %v83
  %v160 = vpop.f32.mrf.mxu0
  %v161 = vadd.f32 %v48, %v160
  %v162 = vpop.f32.mrf.mxu0
  %v163 = vadd.f32 %v48, %v162
  %164 = vmatmul.bf16.gmra.mxu0 %v84
  %v165 = vpop.f32.mrf.mxu0
  %v166 = vadd.f32 %v48, %v165
  %v167 = vpop.f32.mrf.mxu0
  %v168 = vadd.f32 %v48, %v167
  %169 = vmatmul.bf16.gmra.mxu0 %v85
  %v170 = vpop.f32.mrf.mxu0
  %v171 = vadd.f32 %v48, %v170
  %v172 = vpop.f32.mrf.mxu0
  %v173 = vadd.f32 %v48, %v172
  %174 = vmatmul.bf16.gmra.mxu0 %v86
  %v175 = vpop.f32.mrf.mxu0
  %v176 = vadd.f32 %v48, %v175
  %v177 = vpop.f32.mrf.mxu0
  %v178 = vadd.f32 %v48, %v177
  %179 = vmatmul.bf16.gmra.mxu0 %v87
  %v180 = vpop.f32.mrf.mxu0
  %v181 = vadd.f32 %v48, %v180
  %v182 = vpop.f32.mrf.mxu0
  %v183 = vadd.f32 %v48, %v182
  %184 = vmatmul.bf16.gmra.mxu0 %v88
  %v185 = vpop.f32.mrf.mxu0
  %v186 = vadd.f32 %v48, %v185
  %v187 = vpop.f32.mrf.mxu0
  %v188 = vadd.f32 %v48, %v187
  %189 = vmatmul.bf16.gmra.mxu0 %v89
  %v190 = vpop.f32.mrf.mxu0
  %v191 = vadd.f32 %v48, %v190
  %v192 = vpop.f32.mrf.mxu0
  %v193 = vadd.f32 %v48, %v192
  %194 = vdwg.mxu0
  %195 = vst [vmem:[%s3] sm:$0xff] %v156
  %196 = vst [vmem:[%s3 + $0x8] sm:$0xff] %v158
  %197 = vst [vmem:[%s3 + $0x10] sm:$0xff] %v161
  %198 = vst [vmem:[%s3 + $0x18] sm:$0xff] %v163
  %199 = vst [vmem:[%s3 + $0x20] sm:$0xff] %v166
  %200 = vst [vmem:[%s3 + $0x28] sm:$0xff] %v168
  %201 = vst [vmem:[%s3 + $0x30] sm:$0xff] %v171
  %202 = vst [vmem:[%s3 + $0x38] sm:$0xff] %v173
  %203 = vst [vmem:[%s3 + $0x40] sm:$0xff] %v176
  %204 = vst [vmem:[%s3 + $0x48] sm:$0xff] %v178
  %205 = vst [vmem:[%s3 + $0x50] sm:$0xff] %v181
  %206 = vst [vmem:[%s3 + $0x58] sm:$0xff] %v183
  %207 = vst [vmem:[%s3 + $0x60] sm:$0xff] %v186
  %208 = vst [vmem:[%s3 + $0x68] sm:$0xff] %v188
  %209 = vst [vmem:[%s3 + $0x70] sm:$0xff] %v191
  %210 = vst [vmem:[%s3 + $0x78] sm:$0xff] %v193
  // Predicated region
  $region14: #{_forward_padded.3} parent=0 // pred_check
    _
  $region15: #{_forward_padded.3} parent=0 // pred_check_branch
    %212 = sbr.rel (0) target = $region17
  $region16: #{_forward_padded.3} parent=0 // pred_region
    _
  $region17: #{_forward_padded.3} parent=0 // pred_fallthru
    _
  // Predicated region
  $region18: #{_forward_padded.3} parent=0 // pred_check
    _
  $region19: #{_forward_padded.3} parent=0 // pred_check_branch
    %214 = sbr.rel (0) target = $region21
  $region20: #{_forward_padded.3} parent=0 // pred_region
    _
  $region21: #{_forward_padded.3} parent=0 // pred_fallthru
    _

// kernel: _forward_padded.4
$region0: #{_forward_padded.4}
  #allocation0 [shape = 'u32[]', space=smem, size = 0x4, offset = 0x4, fixed_abs, tag = 'smem constant byte address 0x4 - core index']
  #allocation1 [shape = 'u32[72,128]{1,0:T(1,128)}', space=vmem, size = 0x9000, scoped, tag = 'internal scratch']
  #allocation2 [shape = 'f32[8,128]{1,0:T(8,128)}', space=vmem, size = 0x1000, scoped, tag = 'scratch operand']
  %s0 = inlined_call_operand.vmem [shape: f32[8,16,128], index: 0, kind: input, shape index: {}]
  %s1 = inlined_call_operand.vmem [shape: s32[8,1], index: 1, kind: input, shape index: {}]
  %s2 = inlined_call_operand.vmem [shape: bf16[128,128], index: 2, kind: input, shape index: {}]
  %s3 = inlined_call_operand.vmem [shape: bf16[8,16,128], index: 3, kind: output, shape index: {}]
  %s4 = sld [smem:[#allocation0]]
  $region26: #{_forward_padded.4} parent=0
    _
  %s6 = ssub.s32 1, %s4
  %s7 = scalar_select 0, %s6, %s4
  // Predicated region
  $region2: #{_forward_padded.4} parent=0 // pred_check
    _
  $region3: #{_forward_padded.4} parent=0 // pred_check_branch
    %9 = sbr.rel (0) target = $region5
  $region4: #{_forward_padded.4} parent=0 // pred_region
    _
  $region5: #{_forward_padded.4} parent=0 // pred_fallthru
    _
  // Predicated region
  $region6: #{_forward_padded.4} parent=0 // pred_check
    _
  $region7: #{_forward_padded.4} parent=0 // pred_check_branch
    %11 = sbr.rel (0) target = $region9
  $region8: #{_forward_padded.4} parent=0 // pred_region
    _
  $region9: #{_forward_padded.4} parent=0 // pred_fallthru
    _
  // Predicated region
  $region10: #{_forward_padded.4} parent=0 // pred_check
    _
  $region11: #{_forward_padded.4} parent=0 // pred_check_branch
    %13 = sbr.rel (0) target = $region13
  $region12: #{_forward_padded.4} parent=0 // pred_region
    _
  $region13: #{_forward_padded.4} parent=0 // pred_fallthru
    _
  %p14 = scmp.eq.s32.totalorder 0, 0
  // Predicated region
  $region14: #{_forward_padded.4} parent=0 // pred_check
    %p15 = pneg %p14
  $region15: #{_forward_padded.4} parent=0 // pred_check_branch
    %17 = sbr.rel (%p15) target = $region17
  $region16: #{_forward_padded.4} parent=0 // pred_region
    %18 = vst [vmem:[#allocation2] sm:$0xff] 0.0
  $region17: #{_forward_padded.4} parent=0 // pred_fallthru
    _
  %v19 = vld [vmem:[%s2] sm:$0xf]
  %v20 = vld [vmem:[%s2 + $0x4] sm:$0xf]
  %v21 = vld [vmem:[%s2 + $0x8] sm:$0xf]
  %v22 = vld [vmem:[%s2 + $0xc] sm:$0xf]
  %v23 = vld [vmem:[%s2 + $0x10] sm:$0xf]
  %v24 = vld [vmem:[%s2 + $0x14] sm:$0xf]
  %v25 = vld [vmem:[%s2 + $0x18] sm:$0xf]
  %v26 = vld [vmem:[%s2 + $0x1c] sm:$0xf]
  %v27 = vld [vmem:[%s2 + $0x20] sm:$0xf]
  %v28 = vld [vmem:[%s2 + $0x24] sm:$0xf]
  %v29 = vld [vmem:[%s2 + $0x28] sm:$0xf]
  %v30 = vld [vmem:[%s2 + $0x2c] sm:$0xf]
  %v31 = vld [vmem:[%s2 + $0x30] sm:$0xf]
  %v32 = vld [vmem:[%s2 + $0x34] sm:$0xf]
  %v33 = vld [vmem:[%s2 + $0x38] sm:$0xf]
  %v34 = vld [vmem:[%s2 + $0x3c] sm:$0xf]
  %v35 = vld [vmem:[%s1] sm:$0xff]
  %s36 = smul.u32 0, 16
  %v37 = vld [vmem:[#allocation2] sm:$0xff]
  %v38 = vpack.c.bf16 %v37, %v37
  %v39 = vld [vmem:[%s0] sm:$0x1]
  %v40 = vld [vmem:[%s0 + $0x10] sm:$0x1]
  %v41 = vld [vmem:[%s0 + $0x20] sm:$0x1]
  %v42 = vld [vmem:[%s0 + $0x30] sm:$0x1]
  %v43 = vld [vmem:[%s0 + $0x40] sm:$0x1]
  %v44 = vld [vmem:[%s0 + $0x50] sm:$0x1]
  %v45 = vld [vmem:[%s0 + $0x60] sm:$0x1]
  %v46 = vld [vmem:[%s0 + $0x70] sm:$0x1]
  %v63 = vunpack.c.l.b16 %v19
  %v64 = vunpack.c.l.b16 %v20
  %v65 = vunpack.c.l.b16 %v21
  %v66 = vunpack.c.l.b16 %v22
  %v67 = vunpack.c.l.b16 %v23
  %v68 = vunpack.c.l.b16 %v24
  %v69 = vunpack.c.l.b16 %v25
  %v70 = vunpack.c.l.b16 %v26
  %v71 = vunpack.c.l.b16 %v27
  %v72 = vunpack.c.l.b16 %v28
  %v73 = vunpack.c.l.b16 %v29
  %v74 = vunpack.c.l.b16 %v30
  %v75 = vunpack.c.l.b16 %v31
  %v76 = vunpack.c.l.b16 %v32
  %v77 = vunpack.c.l.b16 %v33
  %v78 = vunpack.c.l.b16 %v34
  %v79 = vpack.c.b16 %v64, %v63
  %v80 = vpack.c.b16 %v66, %v65
  %v81 = vpack.c.b16 %v68, %v67
  %v82 = vpack.c.b16 %v70, %v69
  %v83 = vpack.c.b16 %v72, %v71
  %v84 = vpack.c.b16 %v74, %v73
  %v85 = vpack.c.b16 %v76, %v75
  %v86 = vpack.c.b16 %v78, %v77
  %v103 = vrot.slane %v40, 7
  %vm104 = vcmask 1041409
  %v105 = vsel %vm104, %v103, %v39
  %v106 = vrot.slane %v41, 6
  %vm107 = vcmask 1042434
  %v108 = vsel %vm107, %v106, %v105
  %v109 = vrot.slane %v42, 5
  %vm110 = vcmask 1043459
  %v111 = vsel %vm110, %v109, %v108
  %v112 = vrot.slane %v43, 4
  %vm113 = vcmask 1044484
  %v114 = vsel %vm113, %v112, %v111
  %v115 = vrot.slane %v44, 3
  %vm116 = vcmask 1045509
  %v117 = vsel %vm116, %v115, %v114
  %v118 = vrot.slane %v45, 2
  %vm119 = vcmask 1046534
  %v120 = vsel %vm119, %v118, %v117
  %v121 = vrot.slane %v46, 1
  %vm122 = vcmask 1047559
  %v123 = vsel %vm122, %v121, %v120
  %125 = vmatpush.bf16.msra.mxu0 %v86
  %126 = vmatpush.bf16.msra.mxu0 %v85
  %127 = vmatpush.bf16.msra.mxu0 %v84
  %128 = vmatpush.bf16.msra.mxu0 %v83
  %129 = vmatpush.bf16.msra.mxu0 %v82
  %130 = vmatpush.bf16.msra.mxu0 %v81
  %131 = vmatpush.bf16.msra.mxu0 %v80
  %132 = vmatpush.bf16.msra.mxu0 %v79
  %133 = vmatmul.bf16.gmra.mxu0 %v38
  %v134 = vpop.f32.mrf.mxu0
  %v135 = vadd.f32 %v123, %v134
  %v136 = vpop.f32.mrf.mxu0
  %137 = vdwg.mxu0
  %v138 = vtanh.pop %v135
  %v139 = vstv %s36
  %vm140 = vcmp.lt.s32.totalorder %v139, %v35
  %v141 = vsel %vm140, 1, 0
  %142 = vset.pattern.permute.xlu0 0
  %143 = vperm.xlu0 %142, %v141
  %v144 = vpop.permute.xlu0 %143
  %vm145 = vcmp.eq.s32.totalorder %v144, 1
  %v146 = vsel %vm145, %v138, 0.0
  %v147 = vpack.c.bf16 %v146, %v146
  %v149 = vrot.slane %v147, 3
  %vm150 = vcmask 1040384
  %v153 = vsel %vm150, %v147, %v149
  %v155 = vsel %vm104, %v147, %v149
  %v157 = vrot.slane %v155, 1
  %v158 = vsel %vm107, %v147, %v149
  %v160 = vrot.slane %v158, 2
  %v161 = vsel %vm110, %v147, %v149
  %v163 = vrot.slane %v161, 3
  %v164 = vunpack.i.l.s16 %v153
  %v165 = vunpack.i.h.s16 %v153
  %v166 = vunpack.i.l.s16 %v157
  %v167 = vunpack.i.h.s16 %v157
  %v168 = vunpack.i.l.s16 %v160
  %v169 = vunpack.i.h.s16 %v160
  %v170 = vunpack.i.l.s16 %v163
  %v171 = vunpack.i.h.s16 %v163
  %v172 = vpack.i.b16 %v164, %v164
  %v173 = vpack.i.b16 %v165, %v165
  %v174 = vpack.i.b16 %v166, %v166
  %v175 = vpack.i.b16 %v167, %v167
  %v176 = vpack.i.b16 %v168, %v168
  %v177 = vpack.i.b16 %v169, %v169
  %v178 = vpack.i.b16 %v170, %v170
  %v179 = vpack.i.b16 %v171, %v171
  %v181 = vunpack.c.l.s4 286326784
  %v182 = vunpack.c.0.s8 %v181
  %v183 = vperm.slane %v172, %v182
  %v185 = vunpack.c.l.s4 286326784
  %v186 = vunpack.c.0.s8 %v185
  %v187 = vperm.slane %v173, %v186
  %v189 = vunpack.c.l.s4 286326784
  %v190 = vunpack.c.0.s8 %v189
  %v191 = vperm.slane %v174, %v190
  %v193 = vunpack.c.l.s4 286326784
  %v194 = vunpack.c.0.s8 %v193
  %v195 = vperm.slane %v175, %v194
  %v197 = vunpack.c.l.s4 286326784
  %v198 = vunpack.c.0.s8 %v197
  %v199 = vperm.slane %v176, %v198
  %v201 = vunpack.c.l.s4 286326784
  %v202 = vunpack.c.0.s8 %v201
  %v203 = vperm.slane %v177, %v202
  %v205 = vunpack.c.l.s4 286326784
  %v206 = vunpack.c.0.s8 %v205
  %v207 = vperm.slane %v178, %v206
  %v209 = vunpack.c.l.s4 286326784
  %v210 = vunpack.c.0.s8 %v209
  %v211 = vperm.slane %v179, %v210
  %vm220 = vcmask 1040384
  %vm221 = vsmask.f32 256
  %vm222 = vmand %vm220, %vm221
  %v223 = vld [vmem:[%s3] sm:$0x1]
  %v224 = vsel %vm222, %v183, %v223
  %225 = vst [vmem:[%s3] sm:$0x1] %v224
  %v226 = vld [vmem:[%s3 + $0x8] sm:$0x1]
  %v227 = vsel %vm222, %v187, %v226
  %228 = vst [vmem:[%s3 + $0x8] sm:$0x1] %v227
  %v229 = vld [vmem:[%s3 + $0x10] sm:$0x1]
  %v230 = vsel %vm222, %v191, %v229
  %231 = vst [vmem:[%s3 + $0x10] sm:$0x1] %v230
  %v232 = vld [vmem:[%s3 + $0x18] sm:$0x1]
  %v233 = vsel %vm222, %v195, %v232
  %234 = vst [vmem:[%s3 + $0x18] sm:$0x1] %v233
  %v235 = vld [vmem:[%s3 + $0x20] sm:$0x1]
  %v236 = vsel %vm222, %v199, %v235
  %237 = vst [vmem:[%s3 + $0x20] sm:$0x1] %v236
  %v238 = vld [vmem:[%s3 + $0x28] sm:$0x1]
  %v239 = vsel %vm222, %v203, %v238
  %240 = vst [vmem:[%s3 + $0x28] sm:$0x1] %v239
  %v241 = vld [vmem:[%s3 + $0x30] sm:$0x1]
  %v242 = vsel %vm222, %v207, %v241
  %243 = vst [vmem:[%s3 + $0x30] sm:$0x1] %v242
  %v244 = vld [vmem:[%s3 + $0x38] sm:$0x1]
  %v245 = vsel %vm222, %v211, %v244
  %246 = vst [vmem:[%s3 + $0x38] sm:$0x1] %v245
  %v247 = vpack.c.bf16 %v138, %v138
  %v248 = vld [vmem:[%s0 + $0x1] sm:$0x1]
  %v249 = vld [vmem:[%s0 + $0x11] sm:$0x1]
  %v250 = vld [vmem:[%s0 + $0x21] sm:$0x1]
  %v251 = vld [vmem:[%s0 + $0x31] sm:$0x1]
  %v252 = vld [vmem:[%s0 + $0x41] sm:$0x1]
  %v253 = vld [vmem:[%s0 + $0x51] sm:$0x1]
  %v254 = vld [vmem:[%s0 + $0x61] sm:$0x1]
  %v255 = vld [vmem:[%s0 + $0x71] sm:$0x1]
  %v264 = vrot.slane %v249, 7
  %v265 = vsel %vm104, %v264, %v248
  %v266 = vrot.slane %v250, 6
  %v267 = vsel %vm107, %v266, %v265
  %v268 = vrot.slane %v251, 5
  %v269 = vsel %vm110, %v268, %v267
  %v270 = vrot.slane %v252, 4
  %v271 = vsel %vm113, %v270, %v269
  %v272 = vrot.slane %v253, 3
  %v273 = vsel %vm116, %v272, %v271
  %v274 = vrot.slane %v254, 2
  %v275 = vsel %vm119, %v274, %v273
  %v276 = vrot.slane %v255, 1
  %v277 = vsel %vm122, %v276, %v275
  %279 = vmatpush.bf16.msra.mxu0 %v86
  %280 = vmatpush.bf16.msra.mxu0 %v85
  %281 = vmatpush.bf16.msra.mxu0 %v84
  %282 = vmatpush.bf16.msra.mxu0 %v83
  %283 = vmatpush.bf16.msra.mxu0 %v82
  %284 = vmatpush.bf16.msra.mxu0 %v81
  %285 = vmatpush.bf16.msra.mxu0 %v80
  %286 = vmatpush.bf16.msra.mxu0 %v79
  %287 = vmatmul.bf16.gmra.mxu0 %v247
  %v288 = vpop.f32.mrf.mxu0
  %v289 = vadd.f32 %v277, %v288
  %v290 = vpop.f32.mrf.mxu0
  %291 = vdwg.mxu0
  %v292 = vtanh.pop %v289
  %s293 = sadd.s32 %s36, 1
  %v294 = vstv %s293
  %vm295 = vcmp.lt.s32.totalorder %v294, %v35
  %v296 = vsel %vm295, 1, 0
  %297 = vset.pattern.permute.xlu0 0
  %298 = vperm.xlu0 %297, %v296
  %v299 = vpop.permute.xlu0 %298
  %vm300 = vcmp.eq.s32.totalorder %v299, 1
  %v301 = vsel %vm300, %v292, 0.0
  %v302 = vpack.c.bf16 %v301, %v301
  %v304 = vrot.slane %v302, 3
  %v307 = vsel %vm150, %v302, %v304
  %v309 = vsel %vm104, %v302, %v304
  %v311 = vrot.slane %v309, 1
  %v312 = vsel %vm107, %v302, %v304
  %v314 = vrot.slane %v312, 2
  %v315 = vsel %vm110, %v302, %v304
  %v317 = vrot.slane %v315, 3
  %v318 = vunpack.i.l.s16 %v307
  %v319 = vunpack.i.h.s16 %v307
  %v320 = vunpack.i.l.s16 %v311
  %v321 = vunpack.i.h.s16 %v311
  %v322 = vunpack.i.l.s16 %v314
  %v323 = vunpack.i.h.s16 %v314
  %v324 = vunpack.i.l.s16 %v317
  %v325 = vunpack.i.h.s16 %v317
  %v326 = vpack.i.b16 %v318, %v318
  %v327 = vpack.i.b16 %v319, %v319
  %v328 = vpack.i.b16 %v320, %v320
  %v329 = vpack.i.b16 %v321, %v321
  %v330 = vpack.i.b16 %v322, %v322
  %v331 = vpack.i.b16 %v323, %v323
  %v332 = vpack.i.b16 %v324, %v324
  %v333 = vpack.i.b16 %v325, %v325
  %v335 = vunpack.c.l.s4 286326784
  %v336 = vunpack.c.0.s8 %v335
  %v337 = vperm.slane %v326, %v336
  %v339 = vunpack.c.l.s4 286326784
  %v340 = vunpack.c.0.s8 %v339
  %v341 = vperm.slane %v327, %v340
  %v343 = vunpack.c.l.s4 286326784
  %v344 = vunpack.c.0.s8 %v343
  %v345 = vperm.slane %v328, %v344
  %v347 = vunpack.c.l.s4 286326784
  %v348 = vunpack.c.0.s8 %v347
  %v349 = vperm.slane %v329, %v348
  %v351 = vunpack.c.l.s4 286326784
  %v352 = vunpack.c.0.s8 %v351
  %v353 = vperm.slane %v330, %v352
  %v355 = vunpack.c.l.s4 286326784
  %v356 = vunpack.c.0.s8 %v355
  %v357 = vperm.slane %v331, %v356
  %v359 = vunpack.c.l.s4 286326784
  %v360 = vunpack.c.0.s8 %v359
  %v361 = vperm.slane %v332, %v360
  %v363 = vunpack.c.l.s4 286326784
  %v364 = vunpack.c.0.s8 %v363
  %v365 = vperm.slane %v333, %v364
  %vm374 = vsmask.f32 7938
  %vm375 = vmand %vm220, %vm374
  %v376 = vld [vmem:[%s3] sm:$0x1]
  %v377 = vsel %vm375, %v337, %v376
  %378 = vst [vmem:[%s3] sm:$0x1] %v377
  %v379 = vld [vmem:[%s3 + $0x8] sm:$0x1]
  %v380 = vsel %vm375, %v341, %v379
  %381 = vst [vmem:[%s3 + $0x8] sm:$0x1] %v380
  %v382 = vld [vmem:[%s3 + $0x10] sm:$0x1]
  %v383 = vsel %vm375, %v345, %v382
  %384 = vst [vmem:[%s3 + $0x10] sm:$0x1] %v383
  %v385 = vld [vmem:[%s3 + $0x18] sm:$0x1]
  %v386 = vsel %vm375, %v349, %v385
  %387 = vst [vmem:[%s3 + $0x18] sm:$0x1] %v386
  %v388 = vld [vmem:[%s3 + $0x20] sm:$0x1]
  %v389 = vsel %vm375, %v353, %v388
  %390 = vst [vmem:[%s3 + $0x20] sm:$0x1] %v389
  %v391 = vld [vmem:[%s3 + $0x28] sm:$0x1]
  %v392 = vsel %vm375, %v357, %v391
  %393 = vst [vmem:[%s3 + $0x28] sm:$0x1] %v392
  %v394 = vld [vmem:[%s3 + $0x30] sm:$0x1]
  %v395 = vsel %vm375, %v361, %v394
  %396 = vst [vmem:[%s3 + $0x30] sm:$0x1] %v395
  %v397 = vld [vmem:[%s3 + $0x38] sm:$0x1]
  %v398 = vsel %vm375, %v365, %v397
  %399 = vst [vmem:[%s3 + $0x38] sm:$0x1] %v398
  %v400 = vpack.c.bf16 %v292, %v292
  %v401 = vld [vmem:[%s0 + $0x2] sm:$0x1]
  %v402 = vld [vmem:[%s0 + $0x12] sm:$0x1]
  %v403 = vld [vmem:[%s0 + $0x22] sm:$0x1]
  %v404 = vld [vmem:[%s0 + $0x32] sm:$0x1]
  %v405 = vld [vmem:[%s0 + $0x42] sm:$0x1]
  %v406 = vld [vmem:[%s0 + $0x52] sm:$0x1]
  %v407 = vld [vmem:[%s0 + $0x62] sm:$0x1]
  %v408 = vld [vmem:[%s0 + $0x72] sm:$0x1]
  %v417 = vrot.slane %v402, 7
  %v418 = vsel %vm104, %v417, %v401
  %v419 = vrot.slane %v403, 6
  %v420 = vsel %vm107, %v419, %v418
  %v421 = vrot.slane %v404, 5
  %v422 = vsel %vm110, %v421, %v420
  %v423 = vrot.slane %v405, 4
  %v424 = vsel %vm113, %v423, %v422
  %v425 = vrot.slane %v406, 3
  %v426 = vsel %vm116, %v425, %v424
  %v427 = vrot.slane %v407, 2
  %v428 = vsel %vm119, %v427, %v426
  %v429 = vrot.slane %v408, 1
  %v430 = vsel %vm122, %v429, %v428
  %432 = vmatpush.bf16.msra.mxu0 %v86
  %433 = vmatpush.bf16.msra.mxu0 %v85
  %434 = vmatpush.bf16.msra.mxu0 %v84
  %435 = vmatpush.bf16.msra.mxu0 %v83
  %436 = vmatpush.bf16.msra.mxu0 %v82
  %437 = vmatpush.bf16.msra.mxu0 %v81
  %438 = vmatpush.bf16.msra.mxu0 %v80
  %439 = vmatpush.bf16.msra.mxu0 %v79
  %440 = vmatmul.bf16.gmra.mxu0 %v400
  %v441 = vpop.f32.mrf.mxu0
  %v442 = vadd.f32 %v430, %v441
  %v443 = vpop.f32.mrf.mxu0
  %444 = vdwg.mxu0
  %v445 = vtanh.pop %v442
  %s446 = sadd.s32 %s36, 2
  %v447 = vstv %s446
  %vm448 = vcmp.lt.s32.totalorder %v447, %v35
  %v449 = vsel %vm448, 1, 0
  %450 = vset.pattern.permute.xlu0 0
  %451 = vperm.xlu0 %450, %v449
  %v452 = vpop.permute.xlu0 %451
  %vm453 = vcmp.eq.s32.totalorder %v452, 1
  %v454 = vsel %vm453, %v445, 0.0
  %v455 = vpack.c.bf16 %v454, %v454
  %v457 = vrot.slane %v455, 3
  %v460 = vsel %vm150, %v455, %v457
  %v462 = vsel %vm104, %v455, %v457
  %v464 = vrot.slane %v462, 1
  %v465 = vsel %vm107, %v455, %v457
  %v467 = vrot.slane %v465, 2
  %v468 = vsel %vm110, %v455, %v457
  %v470 = vrot.slane %v468, 3
  %v471 = vunpack.i.l.s16 %v460
  %v472 = vunpack.i.h.s16 %v460
  %v473 = vunpack.i.l.s16 %v464
  %v474 = vunpack.i.h.s16 %v464
  %v475 = vunpack.i.l.s16 %v467
  %v476 = vunpack.i.h.s16 %v467
  %v477 = vunpack.i.l.s16 %v470
  %v478 = vunpack.i.h.s16 %v470
  %v479 = vpack.i.b16 %v471, %v471
  %v480 = vpack.i.b16 %v472, %v472
  %v481 = vpack.i.b16 %v473, %v473
  %v482 = vpack.i.b16 %v474, %v474
  %v483 = vpack.i.b16 %v475, %v475
  %v484 = vpack.i.b16 %v476, %v476
  %v485 = vpack.i.b16 %v477, %v477
  %v486 = vpack.i.b16 %v478, %v478
  %v488 = vunpack.c.l.s4 286326784
  %v489 = vunpack.c.0.s8 %v488
  %v490 = vperm.slane %v479, %v489
  %v492 = vunpack.c.l.s4 286326784
  %v493 = vunpack.c.0.s8 %v492
  %v494 = vperm.slane %v480, %v493
  %v496 = vunpack.c.l.s4 286326784
  %v497 = vunpack.c.0.s8 %v496
  %v498 = vperm.slane %v481, %v497
  %v500 = vunpack.c.l.s4 286326784
  %v501 = vunpack.c.0.s8 %v500
  %v502 = vperm.slane %v482, %v501
  %v504 = vunpack.c.l.s4 286326784
  %v505 = vunpack.c.0.s8 %v504
  %v506 = vperm.slane %v483, %v505
  %v508 = vunpack.c.l.s4 286326784
  %v509 = vunpack.c.0.s8 %v508
  %v510 = vperm.slane %v484, %v509
  %v512 = vunpack.c.l.s4 286326784
  %v513 = vunpack.c.0.s8 %v512
  %v514 = vperm.slane %v485, %v513
  %v516 = vunpack.c.l.s4 286326784
  %v517 = vunpack.c.0.s8 %v516
  %v518 = vperm.slane %v486, %v517
  %vm527 = vcmask 1041409
  %vm528 = vsmask.f32 1280
  %vm529 = vmand %vm527, %vm528
  %v530 = vld [vmem:[%s3] sm:$0x2]
  %v531 = vsel %vm529, %v490, %v530
  %532 = vst [vmem:[%s3] sm:$0x2] %v531
  %v533 = vld [vmem:[%s3 + $0x8] sm:$0x2]
  %v534 = vsel %vm529, %v494, %v533
  %535 = vst [vmem:[%s3 + $0x8] sm:$0x2] %v534
  %v536 = vld [vmem:[%s3 + $0x10] sm:$0x2]
  %v537 = vsel %vm529, %v498, %v536
  %538 = vst [vmem:[%s3 + $0x10] sm:$0x2] %v537
  %v539 = vld [vmem:[%s3 + $0x18] sm:$0x2]
  %v540 = vsel %vm529, %v502, %v539
  %541 = vst [vmem:[%s3 + $0x18] sm:$0x2] %v540
  %v542 = vld [vmem:[%s3 + $0x20] sm:$0x2]
  %v543 = vsel %vm529, %v506, %v542
  %544 = vst [vmem:[%s3 + $0x20] sm:$0x2] %v543
  %v545 = vld [vmem:[%s3 + $0x28] sm:$0x2]
  %v546 = vsel %vm529, %v510, %v545
  %547 = vst [vmem:[%s3 + $0x28] sm:$0x2] %v546
  %v548 = vld [vmem:[%s3 + $0x30] sm:$0x2]
  %v549 = vsel %vm529, %v514, %v548
  %550 = vst [vmem:[%s3 + $0x30] sm:$0x2] %v549
  %v551 = vld [vmem:[%s3 + $0x38] sm:$0x2]
  %v552 = vsel %vm529, %v518, %v551
  %553 = vst [vmem:[%s3 + $0x38] sm:$0x2] %v552
  %v554 = vpack.c.bf16 %v445, %v445
  %v555 = vld [vmem:[%s0 + $0x3] sm:$0x1]
  %v556 = vld [vmem:[%s0 + $0x13] sm:$0x1]
  %v557 = vld [vmem:[%s0 + $0x23] sm:$0x1]
  %v558 = vld [vmem:[%s0 + $0x33] sm:$0x1]
  %v559 = vld [vmem:[%s0 + $0x43] sm:$0x1]
  %v560 = vld [vmem:[%s0 + $0x53] sm:$0x1]
  %v561 = vld [vmem:[%s0 + $0x63] sm:$0x1]
  %v562 = vld [vmem:[%s0 + $0x73] sm:$0x1]
  %v571 = vrot.slane %v556, 7
  %v572 = vsel %vm104, %v571, %v555
  %v573 = vrot.slane %v557, 6
  %v574 = vsel %vm107, %v573, %v572
  %v575 = vrot.slane %v558, 5
  %v576 = vsel %vm110, %v575, %v574
  %v577 = vrot.slane %v559, 4
  %v578 = vsel %vm113, %v577, %v576
  %v579 = vrot.slane %v560, 3
  %v580 = vsel %vm116, %v579, %v578
  %v581 = vrot.slane %v561, 2
  %v582 = vsel %vm119, %v581, %v580
  %v583 = vrot.slane %v562, 1
  %v584 = vsel %vm122, %v583, %v582
  %586 = vmatpush.bf16.msra.mxu0 %v86
  %587 = vmatpush.bf16.msra.mxu0 %v85
  %588 = vmatpush.bf16.msra.mxu0 %v84
  %589 = vmatpush.bf16.msra.mxu0 %v83
  %590 = vmatpush.bf16.msra.mxu0 %v82
  %591 = vmatpush.bf16.msra.mxu0 %v81
  %592 = vmatpush.bf16.msra.mxu0 %v80
  %593 = vmatpush.bf16.msra.mxu0 %v79
  %594 = vmatmul.bf16.gmra.mxu0 %v554
  %v595 = vpop.f32.mrf.mxu0
  %v596 = vadd.f32 %v584, %v595
  %v597 = vpop.f32.mrf.mxu0
  %598 = vdwg.mxu0
  %v599 = vtanh.pop %v596
  %s600 = sadd.s32 %s36, 3
  %v601 = vstv %s600
  %vm602 = vcmp.lt.s32.totalorder %v601, %v35
  %v603 = vsel %vm602, 1, 0
  %604 = vset.pattern.permute.xlu0 0
  %605 = vperm.xlu0 %604, %v603
  %v606 = vpop.permute.xlu0 %605
  %vm607 = vcmp.eq.s32.totalorder %v606, 1
  %v608 = vsel %vm607, %v599, 0.0
  %v609 = vpack.c.bf16 %v608, %v608
  %v611 = vrot.slane %v609, 3
  %v614 = vsel %vm150, %v609, %v611
  %v616 = vsel %vm104, %v609, %v611
  %v618 = vrot.slane %v616, 1
  %v619 = vsel %vm107, %v609, %v611
  %v621 = vrot.slane %v619, 2
  %v622 = vsel %vm110, %v609, %v611
  %v624 = vrot.slane %v622, 3
  %v625 = vunpack.i.l.s16 %v614
  %v626 = vunpack.i.h.s16 %v614
  %v627 = vunpack.i.l.s16 %v618
  %v628 = vunpack.i.h.s16 %v618
  %v629 = vunpack.i.l.s16 %v621
  %v630 = vunpack.i.h.s16 %v621
  %v631 = vunpack.i.l.s16 %v624
  %v632 = vunpack.i.h.s16 %v624
  %v633 = vpack.i.b16 %v625, %v625
  %v634 = vpack.i.b16 %v626, %v626
  %v635 = vpack.i.b16 %v627, %v627
  %v636 = vpack.i.b16 %v628, %v628
  %v637 = vpack.i.b16 %v629, %v629
  %v638 = vpack.i.b16 %v630, %v630
  %v639 = vpack.i.b16 %v631, %v631
  %v640 = vpack.i.b16 %v632, %v632
  %v642 = vunpack.c.l.s4 286326784
  %v643 = vunpack.c.0.s8 %v642
  %v644 = vperm.slane %v633, %v643
  %v646 = vunpack.c.l.s4 286326784
  %v647 = vunpack.c.0.s8 %v646
  %v648 = vperm.slane %v634, %v647
  %v650 = vunpack.c.l.s4 286326784
  %v651 = vunpack.c.0.s8 %v650
  %v652 = vperm.slane %v635, %v651
  %v654 = vunpack.c.l.s4 286326784
  %v655 = vunpack.c.0.s8 %v654
  %v656 = vperm.slane %v636, %v655
  %v658 = vunpack.c.l.s4 286326784
  %v659 = vunpack.c.0.s8 %v658
  %v660 = vperm.slane %v637, %v659
  %v662 = vunpack.c.l.s4 286326784
  %v663 = vunpack.c.0.s8 %v662
  %v664 = vperm.slane %v638, %v663
  %v666 = vunpack.c.l.s4 286326784
  %v667 = vunpack.c.0.s8 %v666
  %v668 = vperm.slane %v639, %v667
  %v670 = vunpack.c.l.s4 286326784
  %v671 = vunpack.c.0.s8 %v670
  %v672 = vperm.slane %v640, %v671
  %vm681 = vsmask.f32 7942
  %vm682 = vmand %vm527, %vm681
  %v683 = vld [vmem:[%s3] sm:$0x2]
  %v684 = vsel %vm682, %v644, %v683
  %685 = vst [vmem:[%s3] sm:$0x2] %v684
  %v686 = vld [vmem:[%s3 + $0x8] sm:$0x2]
  %v687 = vsel %vm682, %v648, %v686
  %688 = vst [vmem:[%s3 + $0x8] sm:$0x2] %v687
  %v689 = vld [vmem:[%s3 + $0x10] sm:$0x2]
  %v690 = vsel %vm682, %v652, %v689
  %691 = vst [vmem:[%s3 + $0x10] sm:$0x2] %v690
  %v692 = vld [vmem:[%s3 + $0x18] sm:$0x2]
  %v693 = vsel %vm682, %v656, %v692
  %694 = vst [vmem:[%s3 + $0x18] sm:$0x2] %v693
  %v695 = vld [vmem:[%s3 + $0x20] sm:$0x2]
  %v696 = vsel %vm682, %v660, %v695
  %697 = vst [vmem:[%s3 + $0x20] sm:$0x2] %v696
  %v698 = vld [vmem:[%s3 + $0x28] sm:$0x2]
  %v699 = vsel %vm682, %v664, %v698
  %700 = vst [vmem:[%s3 + $0x28] sm:$0x2] %v699
  %v701 = vld [vmem:[%s3 + $0x30] sm:$0x2]
  %v702 = vsel %vm682, %v668, %v701
  %703 = vst [vmem:[%s3 + $0x30] sm:$0x2] %v702
  %v704 = vld [vmem:[%s3 + $0x38] sm:$0x2]
  %v705 = vsel %vm682, %v672, %v704
  %706 = vst [vmem:[%s3 + $0x38] sm:$0x2] %v705
  %v707 = vpack.c.bf16 %v599, %v599
  %v708 = vld [vmem:[%s0 + $0x4] sm:$0x1]
  %v709 = vld [vmem:[%s0 + $0x14] sm:$0x1]
  %v710 = vld [vmem:[%s0 + $0x24] sm:$0x1]
  %v711 = vld [vmem:[%s0 + $0x34] sm:$0x1]
  %v712 = vld [vmem:[%s0 + $0x44] sm:$0x1]
  %v713 = vld [vmem:[%s0 + $0x54] sm:$0x1]
  %v714 = vld [vmem:[%s0 + $0x64] sm:$0x1]
  %v715 = vld [vmem:[%s0 + $0x74] sm:$0x1]
  %v724 = vrot.slane %v709, 7
  %v725 = vsel %vm104, %v724, %v708
  %v726 = vrot.slane %v710, 6
  %v727 = vsel %vm107, %v726, %v725
  %v728 = vrot.slane %v711, 5
  %v729 = vsel %vm110, %v728, %v727
  %v730 = vrot.slane %v712, 4
  %v731 = vsel %vm113, %v730, %v729
  %v732 = vrot.slane %v713, 3
  %v733 = vsel %vm116, %v732, %v731
  %v734 = vrot.slane %v714, 2
  %v735 = vsel %vm119, %v734, %v733
  %v736 = vrot.slane %v715, 1
  %v737 = vsel %vm122, %v736, %v735
  %739 = vmatpush.bf16.msra.mxu0 %v86
  %740 = vmatpush.bf16.msra.mxu0 %v85
  %741 = vmatpush.bf16.msra.mxu0 %v84
  %742 = vmatpush.bf16.msra.mxu0 %v83
  %743 = vmatpush.bf16.msra.mxu0 %v82
  %744 = vmatpush.bf16.msra.mxu0 %v81
  %745 = vmatpush.bf16.msra.mxu0 %v80
  %746 = vmatpush.bf16.msra.mxu0 %v79
  %747 = vmatmul.bf16.gmra.mxu0 %v707
  %v748 = vpop.f32.mrf.mxu0
  %v749 = vadd.f32 %v737, %v748
  %v750 = vpop.f32.mrf.mxu0
  %751 = vdwg.mxu0
  %v752 = vtanh.pop %v749
  %s753 = sadd.s32 %s36, 4
  %v754 = vstv %s753
  %vm755 = vcmp.lt.s32.totalorder %v754, %v35
  %v756 = vsel %vm755, 1, 0
  %757 = vset.pattern.permute.xlu0 0
  %758 = vperm.xlu0 %757, %v756
  %v759 = vpop.permute.xlu0 %758
  %vm760 = vcmp.eq.s32.totalorder %v759, 1
  %v761 = vsel %vm760, %v752, 0.0
  %v762 = vpack.c.bf16 %v761, %v761
  %v764 = vrot.slane %v762, 3
  %v767 = vsel %vm150, %v762, %v764
  %v769 = vsel %vm104, %v762, %v764
  %v771 = vrot.slane %v769, 1
  %v772 = vsel %vm107, %v762, %v764
  %v774 = vrot.slane %v772, 2
  %v775 = vsel %vm110, %v762, %v764
  %v777 = vrot.slane %v775, 3
  %v778 = vunpack.i.l.s16 %v767
  %v779 = vunpack.i.h.s16 %v767
  %v780 = vunpack.i.l.s16 %v771
  %v781 = vunpack.i.h.s16 %v771
  %v782 = vunpack.i.l.s16 %v774
  %v783 = vunpack.i.h.s16 %v774
  %v784 = vunpack.i.l.s16 %v777
  %v785 = vunpack.i.h.s16 %v777
  %v786 = vpack.i.b16 %v778, %v778
  %v787 = vpack.i.b16 %v779, %v779
  %v788 = vpack.i.b16 %v780, %v780
  %v789 = vpack.i.b16 %v781, %v781
  %v790 = vpack.i.b16 %v782, %v782
  %v791 = vpack.i.b16 %v783, %v783
  %v792 = vpack.i.b16 %v784, %v784
  %v793 = vpack.i.b16 %v785, %v785
  %v795 = vunpack.c.l.s4 286326784
  %v796 = vunpack.c.0.s8 %v795
  %v797 = vperm.slane %v786, %v796
  %v799 = vunpack.c.l.s4 286326784
  %v800 = vunpack.c.0.s8 %v799
  %v801 = vperm.slane %v787, %v800
  %v803 = vunpack.c.l.s4 286326784
  %v804 = vunpack.c.0.s8 %v803
  %v805 = vperm.slane %v788, %v804
  %v807 = vunpack.c.l.s4 286326784
  %v808 = vunpack.c.0.s8 %v807
  %v809 = vperm.slane %v789, %v808
  %v811 = vunpack.c.l.s4 286326784
  %v812 = vunpack.c.0.s8 %v811
  %v813 = vperm.slane %v790, %v812
  %v815 = vunpack.c.l.s4 286326784
  %v816 = vunpack.c.0.s8 %v815
  %v817 = vperm.slane %v791, %v816
  %v819 = vunpack.c.l.s4 286326784
  %v820 = vunpack.c.0.s8 %v819
  %v821 = vperm.slane %v792, %v820
  %v823 = vunpack.c.l.s4 286326784
  %v824 = vunpack.c.0.s8 %v823
  %v825 = vperm.slane %v793, %v824
  %vm834 = vcmask 1042434
  %vm835 = vsmask.f32 2304
  %vm836 = vmand %vm834, %vm835
  %v837 = vld [vmem:[%s3] sm:$0x4]
  %v838 = vsel %vm836, %v797, %v837
  %839 = vst [vmem:[%s3] sm:$0x4] %v838
  %v840 = vld [vmem:[%s3 + $0x8] sm:$0x4]
  %v841 = vsel %vm836, %v801, %v840
  %842 = vst [vmem:[%s3 + $0x8] sm:$0x4] %v841
  %v843 = vld [vmem:[%s3 + $0x10] sm:$0x4]
  %v844 = vsel %vm836, %v805, %v843
  %845 = vst [vmem:[%s3 + $0x10] sm:$0x4] %v844
  %v846 = vld [vmem:[%s3 + $0x18] sm:$0x4]
  %v847 = vsel %vm836, %v809, %v846
  %848 = vst [vmem:[%s3 + $0x18] sm:$0x4] %v847
  %v849 = vld [vmem:[%s3 + $0x20] sm:$0x4]
  %v850 = vsel %vm836, %v813, %v849
  %851 = vst [vmem:[%s3 + $0x20] sm:$0x4] %v850
  %v852 = vld [vmem:[%s3 + $0x28] sm:$0x4]
  %v853 = vsel %vm836, %v817, %v852
  %854 = vst [vmem:[%s3 + $0x28] sm:$0x4] %v853
  %v855 = vld [vmem:[%s3 + $0x30] sm:$0x4]
  %v856 = vsel %vm836, %v821, %v855
  %857 = vst [vmem:[%s3 + $0x30] sm:$0x4] %v856
  %v858 = vld [vmem:[%s3 + $0x38] sm:$0x4]
  %v859 = vsel %vm836, %v825, %v858
  %860 = vst [vmem:[%s3 + $0x38] sm:$0x4] %v859
  %v861 = vpack.c.bf16 %v752, %v752
  %v862 = vld [vmem:[%s0 + $0x5] sm:$0x1]
  %v863 = vld [vmem:[%s0 + $0x15] sm:$0x1]
  %v864 = vld [vmem:[%s0 + $0x25] sm:$0x1]
  %v865 = vld [vmem:[%s0 + $0x35] sm:$0x1]
  %v866 = vld [vmem:[%s0 + $0x45] sm:$0x1]
  %v867 = vld [vmem:[%s0 + $0x55] sm:$0x1]
  %v868 = vld [vmem:[%s0 + $0x65] sm:$0x1]
  %v869 = vld [vmem:[%s0 + $0x75] sm:$0x1]
  %v878 = vrot.slane %v863, 7
  %v879 = vsel %vm104, %v878, %v862
  %v880 = vrot.slane %v864, 6
  %v881 = vsel %vm107, %v880, %v879
  %v882 = vrot.slane %v865, 5
  %v883 = vsel %vm110, %v882, %v881
  %v884 = vrot.slane %v866, 4
  %v885 = vsel %vm113, %v884, %v883
  %v886 = vrot.slane %v867, 3
  %v887 = vsel %vm116, %v886, %v885
  %v888 = vrot.slane %v868, 2
  %v889 = vsel %vm119, %v888, %v887
  %v890 = vrot.slane %v869, 1
  %v891 = vsel %vm122, %v890, %v889
  %893 = vmatpush.bf16.msra.mxu0 %v86
  %894 = vmatpush.bf16.msra.mxu0 %v85
  %895 = vmatpush.bf16.msra.mxu0 %v84
  %896 = vmatpush.bf16.msra.mxu0 %v83
  %897 = vmatpush.bf16.msra.mxu0 %v82
  %898 = vmatpush.bf16.msra.mxu0 %v81
  %899 = vmatpush.bf16.msra.mxu0 %v80
  %900 = vmatpush.bf16.msra.mxu0 %v79
  %901 = vmatmul.bf16.gmra.mxu0 %v861
  %v902 = vpop.f32.mrf.mxu0
  %v903 = vadd.f32 %v891, %v902
  %v904 = vpop.f32.mrf.mxu0
  %905 = vdwg.mxu0
  %v906 = vtanh.pop %v903
  %s907 = sadd.s32 %s36, 5
  %v908 = vstv %s907
  %vm909 = vcmp.lt.s32.totalorder %v908, %v35
  %v910 = vsel %vm909, 1, 0
  %911 = vset.pattern.permute.xlu0 0
  %912 = vperm.xlu0 %911, %v910
  %v913 = vpop.permute.xlu0 %912
  %vm914 = vcmp.eq.s32.totalorder %v913, 1
  %v915 = vsel %vm914, %v906, 0.0
  %v916 = vpack.c.bf16 %v915, %v915
  %v918 = vrot.slane %v916, 3
  %v921 = vsel %vm150, %v916, %v918
  %v923 = vsel %vm104, %v916, %v918
  %v925 = vrot.slane %v923, 1
  %v926 = vsel %vm107, %v916, %v918
  %v928 = vrot.slane %v926, 2
  %v929 = vsel %vm110, %v916, %v918
  %v931 = vrot.slane %v929, 3
  %v932 = vunpack.i.l.s16 %v921
  %v933 = vunpack.i.h.s16 %v921
  %v934 = vunpack.i.l.s16 %v925
  %v935 = vunpack.i.h.s16 %v925
  %v936 = vunpack.i.l.s16 %v928
  %v937 = vunpack.i.h.s16 %v928
  %v938 = vunpack.i.l.s16 %v931
  %v939 = vunpack.i.h.s16 %v931
  %v940 = vpack.i.b16 %v932, %v932
  %v941 = vpack.i.b16 %v933, %v933
  %v942 = vpack.i.b16 %v934, %v934
  %v943 = vpack.i.b16 %v935, %v935
  %v944 = vpack.i.b16 %v936, %v936
  %v945 = vpack.i.b16 %v937, %v937
  %v946 = vpack.i.b16 %v938, %v938
  %v947 = vpack.i.b16 %v939, %v939
  %v949 = vunpack.c.l.s4 286326784
  %v950 = vunpack.c.0.s8 %v949
  %v951 = vperm.slane %v940, %v950
  %v953 = vunpack.c.l.s4 286326784
  %v954 = vunpack.c.0.s8 %v953
  %v955 = vperm.slane %v941, %v954
  %v957 = vunpack.c.l.s4 286326784
  %v958 = vunpack.c.0.s8 %v957
  %v959 = vperm.slane %v942, %v958
  %v961 = vunpack.c.l.s4 286326784
  %v962 = vunpack.c.0.s8 %v961
  %v963 = vperm.slane %v943, %v962
  %v965 = vunpack.c.l.s4 286326784
  %v966 = vunpack.c.0.s8 %v965
  %v967 = vperm.slane %v944, %v966
  %v969 = vunpack.c.l.s4 286326784
  %v970 = vunpack.c.0.s8 %v969
  %v971 = vperm.slane %v945, %v970
  %v973 = vunpack.c.l.s4 286326784
  %v974 = vunpack.c.0.s8 %v973
  %v975 = vperm.slane %v946, %v974
  %v977 = vunpack.c.l.s4 286326784
  %v978 = vunpack.c.0.s8 %v977
  %v979 = vperm.slane %v947, %v978
  %vm988 = vsmask.f32 7946
  %vm989 = vmand %vm834, %vm988
  %v990 = vld [vmem:[%s3] sm:$0x4]
  %v991 = vsel %vm989, %v951, %v990
  %992 = vst [vmem:[%s3] sm:$0x4] %v991
  %v993 = vld [vmem:[%s3 + $0x8] sm:$0x4]
  %v994 = vsel %vm989, %v955, %v993
  %995 = vst [vmem:[%s3 + $0x8] sm:$0x4] %v994
  %v996 = vld [vmem:[%s3 + $0x10] sm:$0x4]
  %v997 = vsel %vm989, %v959, %v996
  %998 = vst [vmem:[%s3 + $0x10] sm:$0x4] %v997
  %v999 = vld [vmem:[%s3 + $0x18] sm:$0x4]
  %v1000 = vsel %vm989, %v963, %v999
  %1001 = vst [vmem:[%s3 + $0x18] sm:$0x4] %v1000
  %v1002 = vld [vmem:[%s3 + $0x20] sm:$0x4]
  %v1003 = vsel %vm989, %v967, %v1002
  %1004 = vst [vmem:[%s3 + $0x20] sm:$0x4] %v1003
  %v1005 = vld [vmem:[%s3 + $0x28] sm:$0x4]
  %v1006 = vsel %vm989, %v971, %v1005
  %1007 = vst [vmem:[%s3 + $0x28] sm:$0x4] %v1006
  %v1008 = vld [vmem:[%s3 + $0x30] sm:$0x4]
  %v1009 = vsel %vm989, %v975, %v1008
  %1010 = vst [vmem:[%s3 + $0x30] sm:$0x4] %v1009
  %v1011 = vld [vmem:[%s3 + $0x38] sm:$0x4]
  %v1012 = vsel %vm989, %v979, %v1011
  %1013 = vst [vmem:[%s3 + $0x38] sm:$0x4] %v1012
  %v1014 = vpack.c.bf16 %v906, %v906
  %v1015 = vld [vmem:[%s0 + $0x6] sm:$0x1]
  %v1016 = vld [vmem:[%s0 + $0x16] sm:$0x1]
  %v1017 = vld [vmem:[%s0 + $0x26] sm:$0x1]
  %v1018 = vld [vmem:[%s0 + $0x36] sm:$0x1]
  %v1019 = vld [vmem:[%s0 + $0x46] sm:$0x1]
  %v1020 = vld [vmem:[%s0 + $0x56] sm:$0x1]
  %v1021 = vld [vmem:[%s0 + $0x66] sm:$0x1]
  %v1022 = vld [vmem:[%s0 + $0x76] sm:$0x1]
  %v1031 = vrot.slane %v1016, 7
  %v1032 = vsel %vm104, %v1031, %v1015
  %v1033 = vrot.slane %v1017, 6
  %v1034 = vsel %vm107, %v1033, %v1032
  %v1035 = vrot.slane %v1018, 5
  %v1036 = vsel %vm110, %v1035, %v1034
  %v1037 = vrot.slane %v1019, 4
  %v1038 = vsel %vm113, %v1037, %v1036
  %v1039 = vrot.slane %v1020, 3
  %v1040 = vsel %vm116, %v1039, %v1038
  %v1041 = vrot.slane %v1021, 2
  %v1042 = vsel %vm119, %v1041, %v1040
  %v1043 = vrot.slane %v1022, 1
  %v1044 = vsel %vm122, %v1043, %v1042
  %1046 = vmatpush.bf16.msra.mxu0 %v86
  %1047 = vmatpush.bf16.msra.mxu0 %v85
  %1048 = vmatpush.bf16.msra.mxu0 %v84
  %1049 = vmatpush.bf16.msra.mxu0 %v83
  %1050 = vmatpush.bf16.msra.mxu0 %v82
  %1051 = vmatpush.bf16.msra.mxu0 %v81
  %1052 = vmatpush.bf16.msra.mxu0 %v80
  %1053 = vmatpush.bf16.msra.mxu0 %v79
  %1054 = vmatmul.bf16.gmra.mxu0 %v1014
  %v1055 = vpop.f32.mrf.mxu0
  %v1056 = vadd.f32 %v1044, %v1055
  %v1057 = vpop.f32.mrf.mxu0
  %1058 = vdwg.mxu0
  %v1059 = vtanh.pop %v1056
  %s1060 = sadd.s32 %s36, 6
  %v1061 = vstv %s1060
  %vm1062 = vcmp.lt.s32.totalorder %v1061, %v35
  %v1063 = vsel %vm1062, 1, 0
  %1064 = vset.pattern.permute.xlu0 0
  %1065 = vperm.xlu0 %1064, %v1063
  %v1066 = vpop.permute.xlu0 %1065
  %vm1067 = vcmp.eq.s32.totalorder %v1066, 1
  %v1068 = vsel %vm1067, %v1059, 0.0
  %v1069 = vpack.c.bf16 %v1068, %v1068
  %v1071 = vrot.slane %v1069, 3
  %v1074 = vsel %vm150, %v1069, %v1071
  %v1076 = vsel %vm104, %v1069, %v1071
  %v1078 = vrot.slane %v1076, 1
  %v1079 = vsel %vm107, %v1069, %v1071
  %v1081 = vrot.slane %v1079, 2
  %v1082 = vsel %vm110, %v1069, %v1071
  %v1084 = vrot.slane %v1082, 3
  %v1085 = vunpack.i.l.s16 %v1074
  %v1086 = vunpack.i.h.s16 %v1074
  %v1087 = vunpack.i.l.s16 %v1078
  %v1088 = vunpack.i.h.s16 %v1078
  %v1089 = vunpack.i.l.s16 %v1081
  %v1090 = vunpack.i.h.s16 %v1081
  %v1091 = vunpack.i.l.s16 %v1084
  %v1092 = vunpack.i.h.s16 %v1084
  %v1093 = vpack.i.b16 %v1085, %v1085
  %v1094 = vpack.i.b16 %v1086, %v1086
  %v1095 = vpack.i.b16 %v1087, %v1087
  %v1096 = vpack.i.b16 %v1088, %v1088
  %v1097 = vpack.i.b16 %v1089, %v1089
  %v1098 = vpack.i.b16 %v1090, %v1090
  %v1099 = vpack.i.b16 %v1091, %v1091
  %v1100 = vpack.i.b16 %v1092, %v1092
  %v1102 = vunpack.c.l.s4 286326784
  %v1103 = vunpack.c.0.s8 %v1102
  %v1104 = vperm.slane %v1093, %v1103
  %v1106 = vunpack.c.l.s4 286326784
  %v1107 = vunpack.c.0.s8 %v1106
  %v1108 = vperm.slane %v1094, %v1107
  %v1110 = vunpack.c.l.s4 286326784
  %v1111 = vunpack.c.0.s8 %v1110
  %v1112 = vperm.slane %v1095, %v1111
  %v1114 = vunpack.c.l.s4 286326784
  %v1115 = vunpack.c.0.s8 %v1114
  %v1116 = vperm.slane %v1096, %v1115
  %v1118 = vunpack.c.l.s4 286326784
  %v1119 = vunpack.c.0.s8 %v1118
  %v1120 = vperm.slane %v1097, %v1119
  %v1122 = vunpack.c.l.s4 286326784
  %v1123 = vunpack.c.0.s8 %v1122
  %v1124 = vperm.slane %v1098, %v1123
  %v1126 = vunpack.c.l.s4 286326784
  %v1127 = vunpack.c.0.s8 %v1126
  %v1128 = vperm.slane %v1099, %v1127
  %v1130 = vunpack.c.l.s4 286326784
  %v1131 = vunpack.c.0.s8 %v1130
  %v1132 = vperm.slane %v1100, %v1131
  %vm1141 = vcmask 1043459
  %vm1142 = vsmask.f32 3328
  %vm1143 = vmand %vm1141, %vm1142
  %v1144 = vld [vmem:[%s3] sm:$0x8]
  %v1145 = vsel %vm1143, %v1104, %v1144
  %1146 = vst [vmem:[%s3] sm:$0x8] %v1145
  %v1147 = vld [vmem:[%s3 + $0x8] sm:$0x8]
  %v1148 = vsel %vm1143, %v1108, %v1147
  %1149 = vst [vmem:[%s3 + $0x8] sm:$0x8] %v1148
  %v1150 = vld [vmem:[%s3 + $0x10] sm:$0x8]
  %v1151 = vsel %vm1143, %v1112, %v1150
  %1152 = vst [vmem:[%s3 + $0x10] sm:$0x8] %v1151
  %v1153 = vld [vmem:[%s3 + $0x18] sm:$0x8]
  %v1154 = vsel %vm1143, %v1116, %v1153
  %1155 = vst [vmem:[%s3 + $0x18] sm:$0x8] %v1154
  %v1156 = vld [vmem:[%s3 + $0x20] sm:$0x8]
  %v1157 = vsel %vm1143, %v1120, %v1156
  %1158 = vst [vmem:[%s3 + $0x20] sm:$0x8] %v1157
  %v1159 = vld [vmem:[%s3 + $0x28] sm:$0x8]
  %v1160 = vsel %vm1143, %v1124, %v1159
  %1161 = vst [vmem:[%s3 + $0x28] sm:$0x8] %v1160
  %v1162 = vld [vmem:[%s3 + $0x30] sm:$0x8]
  %v1163 = vsel %vm1143, %v1128, %v1162
  %1164 = vst [vmem:[%s3 + $0x30] sm:$0x8] %v1163
  %v1165 = vld [vmem:[%s3 + $0x38] sm:$0x8]
  %v1166 = vsel %vm1143, %v1132, %v1165
  %1167 = vst [vmem:[%s3 + $0x38] sm:$0x8] %v1166
  %v1168 = vpack.c.bf16 %v1059, %v1059
  %v1169 = vld [vmem:[%s0 + $0x7] sm:$0x1]
  %v1170 = vld [vmem:[%s0 + $0x17] sm:$0x1]
  %v1171 = vld [vmem:[%s0 + $0x27] sm:$0x1]
  %v1172 = vld [vmem:[%s0 + $0x37] sm:$0x1]
  %v1173 = vld [vmem:[%s0 + $0x47] sm:$0x1]
  %v1174 = vld [vmem:[%s0 + $0x57] sm:$0x1]
  %v1175 = vld [vmem:[%s0 + $0x67] sm:$0x1]
  %v1176 = vld [vmem:[%s0 + $0x77] sm:$0x1]
  %v1185 = vrot.slane %v1170, 7
  %v1186 = vsel %vm104, %v1185, %v1169
  %v1187 = vrot.slane %v1171, 6
  %v1188 = vsel %vm107, %v1187, %v1186
  %v1189 = vrot.slane %v1172, 5
  %v1190 = vsel %vm110, %v1189, %v1188
  %v1191 = vrot.slane %v1173, 4
  %v1192 = vsel %vm113, %v1191, %v1190
  %v1193 = vrot.slane %v1174, 3
  %v1194 = vsel %vm116, %v1193, %v1192
  %v1195 = vrot.slane %v1175, 2
  %v1196 = vsel %vm119, %v1195, %v1194
  %v1197 = vrot.slane %v1176, 1
  %v1198 = vsel %vm122, %v1197, %v1196
  %1200 = vmatpush.bf16.msra.mxu0 %v86
  %1201 = vmatpush.bf16.msra.mxu0 %v85
  %1202 = vmatpush.bf16.msra.mxu0 %v84
  %1203 = vmatpush.bf16.msra.mxu0 %v83
  %1204 = vmatpush.bf16.msra.mxu0 %v82
  %1205 = vmatpush.bf16.msra.mxu0 %v81
  %1206 = vmatpush.bf16.msra.mxu0 %v80
  %1207 = vmatpush.bf16.msra.mxu0 %v79
  %1208 = vmatmul.bf16.gmra.mxu0 %v1168
  %v1209 = vpop.f32.mrf.mxu0
  %v1210 = vadd.f32 %v1198, %v1209
  %v1211 = vpop.f32.mrf.mxu0
  %1212 = vdwg.mxu0
  %v1213 = vtanh.pop %v1210
  %s1214 = sadd.s32 %s36, 7
  %v1215 = vstv %s1214
  %vm1216 = vcmp.lt.s32.totalorder %v1215, %v35
  %v1217 = vsel %vm1216, 1, 0
  %1218 = vset.pattern.permute.xlu0 0
  %1219 = vperm.xlu0 %1218, %v1217
  %v1220 = vpop.permute.xlu0 %1219
  %vm1221 = vcmp.eq.s32.totalorder %v1220, 1
  %v1222 = vsel %vm1221, %v1213, 0.0
  %v1223 = vpack.c.bf16 %v1222, %v1222
  %v1225 = vrot.slane %v1223, 3
  %v1228 = vsel %vm150, %v1223, %v1225
  %v1230 = vsel %vm104, %v1223, %v1225
  %v1232 = vrot.slane %v1230, 1
  %v1233 = vsel %vm107, %v1223, %v1225
  %v1235 = vrot.slane %v1233, 2
  %v1236 = vsel %vm110, %v1223, %v1225
  %v1238 = vrot.slane %v1236, 3
  %v1239 = vunpack.i.l.s16 %v1228
  %v1240 = vunpack.i.h.s16 %v1228
  %v1241 = vunpack.i.l.s16 %v1232
  %v1242 = vunpack.i.h.s16 %v1232
  %v1243 = vunpack.i.l.s16 %v1235
  %v1244 = vunpack.i.h.s16 %v1235
  %v1245 = vunpack.i.l.s16 %v1238
  %v1246 = vunpack.i.h.s16 %v1238
  %v1247 = vpack.i.b16 %v1239, %v1239
  %v1248 = vpack.i.b16 %v1240, %v1240
  %v1249 = vpack.i.b16 %v1241, %v1241
  %v1250 = vpack.i.b16 %v1242, %v1242
  %v1251 = vpack.i.b16 %v1243, %v1243
  %v1252 = vpack.i.b16 %v1244, %v1244
  %v1253 = vpack.i.b16 %v1245, %v1245
  %v1254 = vpack.i.b16 %v1246, %v1246
  %v1256 = vunpack.c.l.s4 286326784
  %v1257 = vunpack.c.0.s8 %v1256
  %v1258 = vperm.slane %v1247, %v1257
  %v1260 = vunpack.c.l.s4 286326784
  %v1261 = vunpack.c.0.s8 %v1260
  %v1262 = vperm.slane %v1248, %v1261
  %v1264 = vunpack.c.l.s4 286326784
  %v1265 = vunpack.c.0.s8 %v1264
  %v1266 = vperm.slane %v1249, %v1265
  %v1268 = vunpack.c.l.s4 286326784
  %v1269 = vunpack.c.0.s8 %v1268
  %v1270 = vperm.slane %v1250, %v1269
  %v1272 = vunpack.c.l.s4 286326784
  %v1273 = vunpack.c.0.s8 %v1272
  %v1274 = vperm.slane %v1251, %v1273
  %v1276 = vunpack.c.l.s4 286326784
  %v1277 = vunpack.c.0.s8 %v1276
  %v1278 = vperm.slane %v1252, %v1277
  %v1280 = vunpack.c.l.s4 286326784
  %v1281 = vunpack.c.0.s8 %v1280
  %v1282 = vperm.slane %v1253, %v1281
  %v1284 = vunpack.c.l.s4 286326784
  %v1285 = vunpack.c.0.s8 %v1284
  %v1286 = vperm.slane %v1254, %v1285
  %vm1295 = vsmask.f32 7950
  %vm1296 = vmand %vm1141, %vm1295
  %v1297 = vld [vmem:[%s3] sm:$0x8]
  %v1298 = vsel %vm1296, %v1258, %v1297
  %1299 = vst [vmem:[%s3] sm:$0x8] %v1298
  %v1300 = vld [vmem:[%s3 + $0x8] sm:$0x8]
  %v1301 = vsel %vm1296, %v1262, %v1300
  %1302 = vst [vmem:[%s3 + $0x8] sm:$0x8] %v1301
  %v1303 = vld [vmem:[%s3 + $0x10] sm:$0x8]
  %v1304 = vsel %vm1296, %v1266, %v1303
  %1305 = vst [vmem:[%s3 + $0x10] sm:$0x8] %v1304
  %v1306 = vld [vmem:[%s3 + $0x18] sm:$0x8]
  %v1307 = vsel %vm1296, %v1270, %v1306
  %1308 = vst [vmem:[%s3 + $0x18] sm:$0x8] %v1307
  %v1309 = vld [vmem:[%s3 + $0x20] sm:$0x8]
  %v1310 = vsel %vm1296, %v1274, %v1309
  %1311 = vst [vmem:[%s3 + $0x20] sm:$0x8] %v1310
  %v1312 = vld [vmem:[%s3 + $0x28] sm:$0x8]
  %v1313 = vsel %vm1296, %v1278, %v1312
  %1314 = vst [vmem:[%s3 + $0x28] sm:$0x8] %v1313
  %v1315 = vld [vmem:[%s3 + $0x30] sm:$0x8]
  %v1316 = vsel %vm1296, %v1282, %v1315
  %1317 = vst [vmem:[%s3 + $0x30] sm:$0x8] %v1316
  %v1318 = vld [vmem:[%s3 + $0x38] sm:$0x8]
  %v1319 = vsel %vm1296, %v1286, %v1318
  %1320 = vst [vmem:[%s3 + $0x38] sm:$0x8] %v1319
  %v1321 = vpack.c.bf16 %v1213, %v1213
  %v1322 = vld [vmem:[%s0 + $0x8] sm:$0x1]
  %v1323 = vld [vmem:[%s0 + $0x18] sm:$0x1]
  %v1324 = vld [vmem:[%s0 + $0x28] sm:$0x1]
  %v1325 = vld [vmem:[%s0 + $0x38] sm:$0x1]
  %v1326 = vld [vmem:[%s0 + $0x48] sm:$0x1]
  %v1327 = vld [vmem:[%s0 + $0x58] sm:$0x1]
  %v1328 = vld [vmem:[%s0 + $0x68] sm:$0x1]
  %v1329 = vld [vmem:[%s0 + $0x78] sm:$0x1]
  %v1338 = vrot.slane %v1323, 7
  %v1339 = vsel %vm104, %v1338, %v1322
  %v1340 = vrot.slane %v1324, 6
  %v1341 = vsel %vm107, %v1340, %v1339
  %v1342 = vrot.slane %v1325, 5
  %v1343 = vsel %vm110, %v1342, %v1341
  %v1344 = vrot.slane %v1326, 4
  %v1345 = vsel %vm113, %v1344, %v1343
  %v1346 = vrot.slane %v1327, 3
  %v1347 = vsel %vm116, %v1346, %v1345
  %v1348 = vrot.slane %v1328, 2
  %v1349 = vsel %vm119, %v1348, %v1347
  %v1350 = vrot.slane %v1329, 1
  %v1351 = vsel %vm122, %v1350, %v1349
  %1353 = vmatpush.bf16.msra.mxu0 %v86
  %1354 = vmatpush.bf16.msra.mxu0 %v85
  %1355 = vmatpush.bf16.msra.mxu0 %v84
  %1356 = vmatpush.bf16.msra.mxu0 %v83
  %1357 = vmatpush.bf16.msra.mxu0 %v82
  %1358 = vmatpush.bf16.msra.mxu0 %v81
  %1359 = vmatpush.bf16.msra.mxu0 %v80
  %1360 = vmatpush.bf16.msra.mxu0 %v79
  %1361 = vmatmul.bf16.gmra.mxu0 %v1321
  %v1362 = vpop.f32.mrf.mxu0
  %v1363 = vadd.f32 %v1351, %v1362
  %v1364 = vpop.f32.mrf.mxu0
  %1365 = vdwg.mxu0
  %v1366 = vtanh.pop %v1363
  %s1367 = sadd.s32 %s36, 8
  %v1368 = vstv %s1367
  %vm1369 = vcmp.lt.s32.totalorder %v1368, %v35
  %v1370 = vsel %vm1369, 1, 0
  %1371 = vset.pattern.permute.xlu0 0
  %1372 = vperm.xlu0 %1371, %v1370
  %v1373 = vpop.permute.xlu0 %1372
  %vm1374 = vcmp.eq.s32.totalorder %v1373, 1
  %v1375 = vsel %vm1374, %v1366, 0.0
  %v1376 = vpack.c.bf16 %v1375, %v1375
  %v1378 = vrot.slane %v1376, 3
  %v1381 = vsel %vm150, %v1376, %v1378
  %v1383 = vsel %vm104, %v1376, %v1378
  %v1385 = vrot.slane %v1383, 1
  %v1386 = vsel %vm107, %v1376, %v1378
  %v1388 = vrot.slane %v1386, 2
  %v1389 = vsel %vm110, %v1376, %v1378
  %v1391 = vrot.slane %v1389, 3
  %v1392 = vunpack.i.l.s16 %v1381
  %v1393 = vunpack.i.h.s16 %v1381
  %v1394 = vunpack.i.l.s16 %v1385
  %v1395 = vunpack.i.h.s16 %v1385
  %v1396 = vunpack.i.l.s16 %v1388
  %v1397 = vunpack.i.h.s16 %v1388
  %v1398 = vunpack.i.l.s16 %v1391
  %v1399 = vunpack.i.h.s16 %v1391
  %v1400 = vpack.i.b16 %v1392, %v1392
  %v1401 = vpack.i.b16 %v1393, %v1393
  %v1402 = vpack.i.b16 %v1394, %v1394
  %v1403 = vpack.i.b16 %v1395, %v1395
  %v1404 = vpack.i.b16 %v1396, %v1396
  %v1405 = vpack.i.b16 %v1397, %v1397
  %v1406 = vpack.i.b16 %v1398, %v1398
  %v1407 = vpack.i.b16 %v1399, %v1399
  %v1409 = vunpack.c.l.s4 286326784
  %v1410 = vunpack.c.0.s8 %v1409
  %v1411 = vperm.slane %v1400, %v1410
  %v1413 = vunpack.c.l.s4 286326784
  %v1414 = vunpack.c.0.s8 %v1413
  %v1415 = vperm.slane %v1401, %v1414
  %v1417 = vunpack.c.l.s4 286326784
  %v1418 = vunpack.c.0.s8 %v1417
  %v1419 = vperm.slane %v1402, %v1418
  %v1421 = vunpack.c.l.s4 286326784
  %v1422 = vunpack.c.0.s8 %v1421
  %v1423 = vperm.slane %v1403, %v1422
  %v1425 = vunpack.c.l.s4 286326784
  %v1426 = vunpack.c.0.s8 %v1425
  %v1427 = vperm.slane %v1404, %v1426
  %v1429 = vunpack.c.l.s4 286326784
  %v1430 = vunpack.c.0.s8 %v1429
  %v1431 = vperm.slane %v1405, %v1430
  %v1433 = vunpack.c.l.s4 286326784
  %v1434 = vunpack.c.0.s8 %v1433
  %v1435 = vperm.slane %v1406, %v1434
  %v1437 = vunpack.c.l.s4 286326784
  %v1438 = vunpack.c.0.s8 %v1437
  %v1439 = vperm.slane %v1407, %v1438
  %v1448 = vld [vmem:[%s3 + $0x4] sm:$0x1]
  %v1449 = vsel %vm222, %v1411, %v1448
  %1450 = vst [vmem:[%s3 + $0x4] sm:$0x1] %v1449
  %v1451 = vld [vmem:[%s3 + $0xc] sm:$0x1]
  %v1452 = vsel %vm222, %v1415, %v1451
  %1453 = vst [vmem:[%s3 + $0xc] sm:$0x1] %v1452
  %v1454 = vld [vmem:[%s3 + $0x14] sm:$0x1]
  %v1455 = vsel %vm222, %v1419, %v1454
  %1456 = vst [vmem:[%s3 + $0x14] sm:$0x1] %v1455
  %v1457 = vld [vmem:[%s3 + $0x1c] sm:$0x1]
  %v1458 = vsel %vm222, %v1423, %v1457
  %1459 = vst [vmem:[%s3 + $0x1c] sm:$0x1] %v1458
  %v1460 = vld [vmem:[%s3 + $0x24] sm:$0x1]
  %v1461 = vsel %vm222, %v1427, %v1460
  %1462 = vst [vmem:[%s3 + $0x24] sm:$0x1] %v1461
  %v1463 = vld [vmem:[%s3 + $0x2c] sm:$0x1]
  %v1464 = vsel %vm222, %v1431, %v1463
  %1465 = vst [vmem:[%s3 + $0x2c] sm:$0x1] %v1464
  %v1466 = vld [vmem:[%s3 + $0x34] sm:$0x1]
  %v1467 = vsel %vm222, %v1435, %v1466
  %1468 = vst [vmem:[%s3 + $0x34] sm:$0x1] %v1467
  %v1469 = vld [vmem:[%s3 + $0x3c] sm:$0x1]
  %v1470 = vsel %vm222, %v1439, %v1469
  %1471 = vst [vmem:[%s3 + $0x3c] sm:$0x1] %v1470
  %v1472 = vpack.c.bf16 %v1366, %v1366
  %v1473 = vld [vmem:[%s0 + $0x9] sm:$0x1]
  %v1474 = vld [vmem:[%s0 + $0x19] sm:$0x1]
  %v1475 = vld [vmem:[%s0 + $0x29] sm:$0x1]
  %v1476 = vld [vmem:[%s0 + $0x39] sm:$0x1]
  %v1477 = vld [vmem:[%s0 + $0x49] sm:$0x1]
  %v1478 = vld [vmem:[%s0 + $0x59] sm:$0x1]
  %v1479 = vld [vmem:[%s0 + $0x69] sm:$0x1]
  %v1480 = vld [vmem:[%s0 + $0x79] sm:$0x1]
  %v1489 = vrot.slane %v1474, 7
  %v1490 = vsel %vm104, %v1489, %v1473
  %v1491 = vrot.slane %v1475, 6
  %v1492 = vsel %vm107, %v1491, %v1490
  %v1493 = vrot.slane %v1476, 5
  %v1494 = vsel %vm110, %v1493, %v1492
  %v1495 = vrot.slane %v1477, 4
  %v1496 = vsel %vm113, %v1495, %v1494
  %v1497 = vrot.slane %v1478, 3
  %v1498 = vsel %vm116, %v1497, %v1496
  %v1499 = vrot.slane %v1479, 2
  %v1500 = vsel %vm119, %v1499, %v1498
  %v1501 = vrot.slane %v1480, 1
  %v1502 = vsel %vm122, %v1501, %v1500
  %1504 = vmatpush.bf16.msra.mxu0 %v86
  %1505 = vmatpush.bf16.msra.mxu0 %v85
  %1506 = vmatpush.bf16.msra.mxu0 %v84
  %1507 = vmatpush.bf16.msra.mxu0 %v83
  %1508 = vmatpush.bf16.msra.mxu0 %v82
  %1509 = vmatpush.bf16.msra.mxu0 %v81
  %1510 = vmatpush.bf16.msra.mxu0 %v80
  %1511 = vmatpush.bf16.msra.mxu0 %v79
  %1512 = vmatmul.bf16.gmra.mxu0 %v1472
  %v1513 = vpop.f32.mrf.mxu0
  %v1514 = vadd.f32 %v1502, %v1513
  %v1515 = vpop.f32.mrf.mxu0
  %1516 = vdwg.mxu0
  %v1517 = vtanh.pop %v1514
  %s1518 = sadd.s32 %s36, 9
  %v1519 = vstv %s1518
  %vm1520 = vcmp.lt.s32.totalorder %v1519, %v35
  %v1521 = vsel %vm1520, 1, 0
  %1522 = vset.pattern.permute.xlu0 0
  %1523 = vperm.xlu0 %1522, %v1521
  %v1524 = vpop.permute.xlu0 %1523
  %vm1525 = vcmp.eq.s32.totalorder %v1524, 1
  %v1526 = vsel %vm1525, %v1517, 0.0
  %v1527 = vpack.c.bf16 %v1526, %v1526
  %v1529 = vrot.slane %v1527, 3
  %v1532 = vsel %vm150, %v1527, %v1529
  %v1534 = vsel %vm104, %v1527, %v1529
  %v1536 = vrot.slane %v1534, 1
  %v1537 = vsel %vm107, %v1527, %v1529
  %v1539 = vrot.slane %v1537, 2
  %v1540 = vsel %vm110, %v1527, %v1529
  %v1542 = vrot.slane %v1540, 3
  %v1543 = vunpack.i.l.s16 %v1532
  %v1544 = vunpack.i.h.s16 %v1532
  %v1545 = vunpack.i.l.s16 %v1536
  %v1546 = vunpack.i.h.s16 %v1536
  %v1547 = vunpack.i.l.s16 %v1539
  %v1548 = vunpack.i.h.s16 %v1539
  %v1549 = vunpack.i.l.s16 %v1542
  %v1550 = vunpack.i.h.s16 %v1542
  %v1551 = vpack.i.b16 %v1543, %v1543
  %v1552 = vpack.i.b16 %v1544, %v1544
  %v1553 = vpack.i.b16 %v1545, %v1545
  %v1554 = vpack.i.b16 %v1546, %v1546
  %v1555 = vpack.i.b16 %v1547, %v1547
  %v1556 = vpack.i.b16 %v1548, %v1548
  %v1557 = vpack.i.b16 %v1549, %v1549
  %v1558 = vpack.i.b16 %v1550, %v1550
  %v1560 = vunpack.c.l.s4 286326784
  %v1561 = vunpack.c.0.s8 %v1560
  %v1562 = vperm.slane %v1551, %v1561
  %v1564 = vunpack.c.l.s4 286326784
  %v1565 = vunpack.c.0.s8 %v1564
  %v1566 = vperm.slane %v1552, %v1565
  %v1568 = vunpack.c.l.s4 286326784
  %v1569 = vunpack.c.0.s8 %v1568
  %v1570 = vperm.slane %v1553, %v1569
  %v1572 = vunpack.c.l.s4 286326784
  %v1573 = vunpack.c.0.s8 %v1572
  %v1574 = vperm.slane %v1554, %v1573
  %v1576 = vunpack.c.l.s4 286326784
  %v1577 = vunpack.c.0.s8 %v1576
  %v1578 = vperm.slane %v1555, %v1577
  %v1580 = vunpack.c.l.s4 286326784
  %v1581 = vunpack.c.0.s8 %v1580
  %v1582 = vperm.slane %v1556, %v1581
  %v1584 = vunpack.c.l.s4 286326784
  %v1585 = vunpack.c.0.s8 %v1584
  %v1586 = vperm.slane %v1557, %v1585
  %v1588 = vunpack.c.l.s4 286326784
  %v1589 = vunpack.c.0.s8 %v1588
  %v1590 = vperm.slane %v1558, %v1589
  %v1599 = vld [vmem:[%s3 + $0x4] sm:$0x1]
  %v1600 = vsel %vm375, %v1562, %v1599
  %1601 = vst [vmem:[%s3 + $0x4] sm:$0x1] %v1600
  %v1602 = vld [vmem:[%s3 + $0xc] sm:$0x1]
  %v1603 = vsel %vm375, %v1566, %v1602
  %1604 = vst [vmem:[%s3 + $0xc] sm:$0x1] %v1603
  %v1605 = vld [vmem:[%s3 + $0x14] sm:$0x1]
  %v1606 = vsel %vm375, %v1570, %v1605
  %1607 = vst [vmem:[%s3 + $0x14] sm:$0x1] %v1606
  %v1608 = vld [vmem:[%s3 + $0x1c] sm:$0x1]
  %v1609 = vsel %vm375, %v1574, %v1608
  %1610 = vst [vmem:[%s3 + $0x1c] sm:$0x1] %v1609
  %v1611 = vld [vmem:[%s3 + $0x24] sm:$0x1]
  %v1612 = vsel %vm375, %v1578, %v1611
  %1613 = vst [vmem:[%s3 + $0x24] sm:$0x1] %v1612
  %v1614 = vld [vmem:[%s3 + $0x2c] sm:$0x1]
  %v1615 = vsel %vm375, %v1582, %v1614
  %1616 = vst [vmem:[%s3 + $0x2c] sm:$0x1] %v1615
  %v1617 = vld [vmem:[%s3 + $0x34] sm:$0x1]
  %v1618 = vsel %vm375, %v1586, %v1617
  %1619 = vst [vmem:[%s3 + $0x34] sm:$0x1] %v1618
  %v1620 = vld [vmem:[%s3 + $0x3c] sm:$0x1]
  %v1621 = vsel %vm375, %v1590, %v1620
  %1622 = vst [vmem:[%s3 + $0x3c] sm:$0x1] %v1621
  %v1623 = vpack.c.bf16 %v1517, %v1517
  %v1624 = vld [vmem:[%s0 + $0xa] sm:$0x1]
  %v1625 = vld [vmem:[%s0 + $0x1a] sm:$0x1]
  %v1626 = vld [vmem:[%s0 + $0x2a] sm:$0x1]
  %v1627 = vld [vmem:[%s0 + $0x3a] sm:$0x1]
  %v1628 = vld [vmem:[%s0 + $0x4a] sm:$0x1]
  %v1629 = vld [vmem:[%s0 + $0x5a] sm:$0x1]
  %v1630 = vld [vmem:[%s0 + $0x6a] sm:$0x1]
  %v1631 = vld [vmem:[%s0 + $0x7a] sm:$0x1]
  %v1640 = vrot.slane %v1625, 7
  %v1641 = vsel %vm104, %v1640, %v1624
  %v1642 = vrot.slane %v1626, 6
  %v1643 = vsel %vm107, %v1642, %v1641
  %v1644 = vrot.slane %v1627, 5
  %v1645 = vsel %vm110, %v1644, %v1643
  %v1646 = vrot.slane %v1628, 4
  %v1647 = vsel %vm113, %v1646, %v1645
  %v1648 = vrot.slane %v1629, 3
  %v1649 = vsel %vm116, %v1648, %v1647
  %v1650 = vrot.slane %v1630, 2
  %v1651 = vsel %vm119, %v1650, %v1649
  %v1652 = vrot.slane %v1631, 1
  %v1653 = vsel %vm122, %v1652, %v1651
  %1655 = vmatpush.bf16.msra.mxu0 %v86
  %1656 = vmatpush.bf16.msra.mxu0 %v85
  %1657 = vmatpush.bf16.msra.mxu0 %v84
  %1658 = vmatpush.bf16.msra.mxu0 %v83
  %1659 = vmatpush.bf16.msra.mxu0 %v82
  %1660 = vmatpush.bf16.msra.mxu0 %v81
  %1661 = vmatpush.bf16.msra.mxu0 %v80
  %1662 = vmatpush.bf16.msra.mxu0 %v79
  %1663 = vmatmul.bf16.gmra.mxu0 %v1623
  %v1664 = vpop.f32.mrf.mxu0
  %v1665 = vadd.f32 %v1653, %v1664
  %v1666 = vpop.f32.mrf.mxu0
  %1667 = vdwg.mxu0
  %v1668 = vtanh.pop %v1665
  %s1669 = sadd.s32 %s36, 10
  %v1670 = vstv %s1669
  %vm1671 = vcmp.lt.s32.totalorder %v1670, %v35
  %v1672 = vsel %vm1671, 1, 0
  %1673 = vset.pattern.permute.xlu0 0
  %1674 = vperm.xlu0 %1673, %v1672
  %v1675 = vpop.permute.xlu0 %1674
  %vm1676 = vcmp.eq.s32.totalorder %v1675, 1
  %v1677 = vsel %vm1676, %v1668, 0.0
  %v1678 = vpack.c.bf16 %v1677, %v1677
  %v1680 = vrot.slane %v1678, 3
  %v1683 = vsel %vm150, %v1678, %v1680
  %v1685 = vsel %vm104, %v1678, %v1680
  %v1687 = vrot.slane %v1685, 1
  %v1688 = vsel %vm107, %v1678, %v1680
  %v1690 = vrot.slane %v1688, 2
  %v1691 = vsel %vm110, %v1678, %v1680
  %v1693 = vrot.slane %v1691, 3
  %v1694 = vunpack.i.l.s16 %v1683
  %v1695 = vunpack.i.h.s16 %v1683
  %v1696 = vunpack.i.l.s16 %v1687
  %v1697 = vunpack.i.h.s16 %v1687
  %v1698 = vunpack.i.l.s16 %v1690
  %v1699 = vunpack.i.h.s16 %v1690
  %v1700 = vunpack.i.l.s16 %v1693
  %v1701 = vunpack.i.h.s16 %v1693
  %v1702 = vpack.i.b16 %v1694, %v1694
  %v1703 = vpack.i.b16 %v1695, %v1695
  %v1704 = vpack.i.b16 %v1696, %v1696
  %v1705 = vpack.i.b16 %v1697, %v1697
  %v1706 = vpack.i.b16 %v1698, %v1698
  %v1707 = vpack.i.b16 %v1699, %v1699
  %v1708 = vpack.i.b16 %v1700, %v1700
  %v1709 = vpack.i.b16 %v1701, %v1701
  %v1711 = vunpack.c.l.s4 286326784
  %v1712 = vunpack.c.0.s8 %v1711
  %v1713 = vperm.slane %v1702, %v1712
  %v1715 = vunpack.c.l.s4 286326784
  %v1716 = vunpack.c.0.s8 %v1715
  %v1717 = vperm.slane %v1703, %v1716
  %v1719 = vunpack.c.l.s4 286326784
  %v1720 = vunpack.c.0.s8 %v1719
  %v1721 = vperm.slane %v1704, %v1720
  %v1723 = vunpack.c.l.s4 286326784
  %v1724 = vunpack.c.0.s8 %v1723
  %v1725 = vperm.slane %v1705, %v1724
  %v1727 = vunpack.c.l.s4 286326784
  %v1728 = vunpack.c.0.s8 %v1727
  %v1729 = vperm.slane %v1706, %v1728
  %v1731 = vunpack.c.l.s4 286326784
  %v1732 = vunpack.c.0.s8 %v1731
  %v1733 = vperm.slane %v1707, %v1732
  %v1735 = vunpack.c.l.s4 286326784
  %v1736 = vunpack.c.0.s8 %v1735
  %v1737 = vperm.slane %v1708, %v1736
  %v1739 = vunpack.c.l.s4 286326784
  %v1740 = vunpack.c.0.s8 %v1739
  %v1741 = vperm.slane %v1709, %v1740
  %v1750 = vld [vmem:[%s3 + $0x4] sm:$0x2]
  %v1751 = vsel %vm529, %v1713, %v1750
  %1752 = vst [vmem:[%s3 + $0x4] sm:$0x2] %v1751
  %v1753 = vld [vmem:[%s3 + $0xc] sm:$0x2]
  %v1754 = vsel %vm529, %v1717, %v1753
  %1755 = vst [vmem:[%s3 + $0xc] sm:$0x2] %v1754
  %v1756 = vld [vmem:[%s3 + $0x14] sm:$0x2]
  %v1757 = vsel %vm529, %v1721, %v1756
  %1758 = vst [vmem:[%s3 + $0x14] sm:$0x2] %v1757
  %v1759 = vld [vmem:[%s3 + $0x1c] sm:$0x2]
  %v1760 = vsel %vm529, %v1725, %v1759
  %1761 = vst [vmem:[%s3 + $0x1c] sm:$0x2] %v1760
  %v1762 = vld [vmem:[%s3 + $0x24] sm:$0x2]
  %v1763 = vsel %vm529, %v1729, %v1762
  %1764 = vst [vmem:[%s3 + $0x24] sm:$0x2] %v1763
  %v1765 = vld [vmem:[%s3 + $0x2c] sm:$0x2]
  %v1766 = vsel %vm529, %v1733, %v1765
  %1767 = vst [vmem:[%s3 + $0x2c] sm:$0x2] %v1766
  %v1768 = vld [vmem:[%s3 + $0x34] sm:$0x2]
  %v1769 = vsel %vm529, %v1737, %v1768
  %1770 = vst [vmem:[%s3 + $0x34] sm:$0x2] %v1769
  %v1771 = vld [vmem:[%s3 + $0x3c] sm:$0x2]
  %v1772 = vsel %vm529, %v1741, %v1771
  %1773 = vst [vmem:[%s3 + $0x3c] sm:$0x2] %v1772
  %v1774 = vpack.c.bf16 %v1668, %v1668
  %v1775 = vld [vmem:[%s0 + $0xb] sm:$0x1]
  %v1776 = vld [vmem:[%s0 + $0x1b] sm:$0x1]
  %v1777 = vld [vmem:[%s0 + $0x2b] sm:$0x1]
  %v1778 = vld [vmem:[%s0 + $0x3b] sm:$0x1]
  %v1779 = vld [vmem:[%s0 + $0x4b] sm:$0x1]
  %v1780 = vld [vmem:[%s0 + $0x5b] sm:$0x1]
  %v1781 = vld [vmem:[%s0 + $0x6b] sm:$0x1]
  %v1782 = vld [vmem:[%s0 + $0x7b] sm:$0x1]
  %v1791 = vrot.slane %v1776, 7
  %v1792 = vsel %vm104, %v1791, %v1775
  %v1793 = vrot.slane %v1777, 6
  %v1794 = vsel %vm107, %v1793, %v1792
  %v1795 = vrot.slane %v1778, 5
  %v1796 = vsel %vm110, %v1795, %v1794
  %v1797 = vrot.slane %v1779, 4
  %v1798 = vsel %vm113, %v1797, %v1796
  %v1799 = vrot.slane %v1780, 3
  %v1800 = vsel %vm116, %v1799, %v1798
  %v1801 = vrot.slane %v1781, 2
  %v1802 = vsel %vm119, %v1801, %v1800
  %v1803 = vrot.slane %v1782, 1
  %v1804 = vsel %vm122, %v1803, %v1802
  %1806 = vmatpush.bf16.msra.mxu0 %v86
  %1807 = vmatpush.bf16.msra.mxu0 %v85
  %1808 = vmatpush.bf16.msra.mxu0 %v84
  %1809 = vmatpush.bf16.msra.mxu0 %v83
  %1810 = vmatpush.bf16.msra.mxu0 %v82
  %1811 = vmatpush.bf16.msra.mxu0 %v81
  %1812 = vmatpush.bf16.msra.mxu0 %v80
  %1813 = vmatpush.bf16.msra.mxu0 %v79
  %1814 = vmatmul.bf16.gmra.mxu0 %v1774
  %v1815 = vpop.f32.mrf.mxu0
  %v1816 = vadd.f32 %v1804, %v1815
  %v1817 = vpop.f32.mrf.mxu0
  %1818 = vdwg.mxu0
  %v1819 = vtanh.pop %v1816
  %s1820 = sadd.s32 %s36, 11
  %v1821 = vstv %s1820
  %vm1822 = vcmp.lt.s32.totalorder %v1821, %v35
  %v1823 = vsel %vm1822, 1, 0
  %1824 = vset.pattern.permute.xlu0 0
  %1825 = vperm.xlu0 %1824, %v1823
  %v1826 = vpop.permute.xlu0 %1825
  %vm1827 = vcmp.eq.s32.totalorder %v1826, 1
  %v1828 = vsel %vm1827, %v1819, 0.0
  %v1829 = vpack.c.bf16 %v1828, %v1828
  %v1831 = vrot.slane %v1829, 3
  %v1834 = vsel %vm150, %v1829, %v1831
  %v1836 = vsel %vm104, %v1829, %v1831
  %v1838 = vrot.slane %v1836, 1
  %v1839 = vsel %vm107, %v1829, %v1831
  %v1841 = vrot.slane %v1839, 2
  %v1842 = vsel %vm110, %v1829, %v1831
  %v1844 = vrot.slane %v1842, 3
  %v1845 = vunpack.i.l.s16 %v1834
  %v1846 = vunpack.i.h.s16 %v1834
  %v1847 = vunpack.i.l.s16 %v1838
  %v1848 = vunpack.i.h.s16 %v1838
  %v1849 = vunpack.i.l.s16 %v1841
  %v1850 = vunpack.i.h.s16 %v1841
  %v1851 = vunpack.i.l.s16 %v1844
  %v1852 = vunpack.i.h.s16 %v1844
  %v1853 = vpack.i.b16 %v1845, %v1845
  %v1854 = vpack.i.b16 %v1846, %v1846
  %v1855 = vpack.i.b16 %v1847, %v1847
  %v1856 = vpack.i.b16 %v1848, %v1848
  %v1857 = vpack.i.b16 %v1849, %v1849
  %v1858 = vpack.i.b16 %v1850, %v1850
  %v1859 = vpack.i.b16 %v1851, %v1851
  %v1860 = vpack.i.b16 %v1852, %v1852
  %v1862 = vunpack.c.l.s4 286326784
  %v1863 = vunpack.c.0.s8 %v1862
  %v1864 = vperm.slane %v1853, %v1863
  %v1866 = vunpack.c.l.s4 286326784
  %v1867 = vunpack.c.0.s8 %v1866
  %v1868 = vperm.slane %v1854, %v1867
  %v1870 = vunpack.c.l.s4 286326784
  %v1871 = vunpack.c.0.s8 %v1870
  %v1872 = vperm.slane %v1855, %v1871
  %v1874 = vunpack.c.l.s4 286326784
  %v1875 = vunpack.c.0.s8 %v1874
  %v1876 = vperm.slane %v1856, %v1875
  %v1878 = vunpack.c.l.s4 286326784
  %v1879 = vunpack.c.0.s8 %v1878
  %v1880 = vperm.slane %v1857, %v1879
  %v1882 = vunpack.c.l.s4 286326784
  %v1883 = vunpack.c.0.s8 %v1882
  %v1884 = vperm.slane %v1858, %v1883
  %v1886 = vunpack.c.l.s4 286326784
  %v1887 = vunpack.c.0.s8 %v1886
  %v1888 = vperm.slane %v1859, %v1887
  %v1890 = vunpack.c.l.s4 286326784
  %v1891 = vunpack.c.0.s8 %v1890
  %v1892 = vperm.slane %v1860, %v1891
  %v1901 = vld [vmem:[%s3 + $0x4] sm:$0x2]
  %v1902 = vsel %vm682, %v1864, %v1901
  %1903 = vst [vmem:[%s3 + $0x4] sm:$0x2] %v1902
  %v1904 = vld [vmem:[%s3 + $0xc] sm:$0x2]
  %v1905 = vsel %vm682, %v1868, %v1904
  %1906 = vst [vmem:[%s3 + $0xc] sm:$0x2] %v1905
  %v1907 = vld [vmem:[%s3 + $0x14] sm:$0x2]
  %v1908 = vsel %vm682, %v1872, %v1907
  %1909 = vst [vmem:[%s3 + $0x14] sm:$0x2] %v1908
  %v1910 = vld [vmem:[%s3 + $0x1c] sm:$0x2]
  %v1911 = vsel %vm682, %v1876, %v1910
  %1912 = vst [vmem:[%s3 + $0x1c] sm:$0x2] %v1911
  %v1913 = vld [vmem:[%s3 + $0x24] sm:$0x2]
  %v1914 = vsel %vm682, %v1880, %v1913
  %1915 = vst [vmem:[%s3 + $0x24] sm:$0x2] %v1914
  %v1916 = vld [vmem:[%s3 + $0x2c] sm:$0x2]
  %v1917 = vsel %vm682, %v1884, %v1916
  %1918 = vst [vmem:[%s3 + $0x2c] sm:$0x2] %v1917
  %v1919 = vld [vmem:[%s3 + $0x34] sm:$0x2]
  %v1920 = vsel %vm682, %v1888, %v1919
  %1921 = vst [vmem:[%s3 + $0x34] sm:$0x2] %v1920
  %v1922 = vld [vmem:[%s3 + $0x3c] sm:$0x2]
  %v1923 = vsel %vm682, %v1892, %v1922
  %1924 = vst [vmem:[%s3 + $0x3c] sm:$0x2] %v1923
  %v1925 = vpack.c.bf16 %v1819, %v1819
  %v1926 = vld [vmem:[%s0 + $0xc] sm:$0x1]
  %v1927 = vld [vmem:[%s0 + $0x1c] sm:$0x1]
  %v1928 = vld [vmem:[%s0 + $0x2c] sm:$0x1]
  %v1929 = vld [vmem:[%s0 + $0x3c] sm:$0x1]
  %v1930 = vld [vmem:[%s0 + $0x4c] sm:$0x1]
  %v1931 = vld [vmem:[%s0 + $0x5c] sm:$0x1]
  %v1932 = vld [vmem:[%s0 + $0x6c] sm:$0x1]
  %v1933 = vld [vmem:[%s0 + $0x7c] sm:$0x1]
  %v1942 = vrot.slane %v1927, 7
  %v1943 = vsel %vm104, %v1942, %v1926
  %v1944 = vrot.slane %v1928, 6
  %v1945 = vsel %vm107, %v1944, %v1943
  %v1946 = vrot.slane %v1929, 5
  %v1947 = vsel %vm110, %v1946, %v1945
  %v1948 = vrot.slane %v1930, 4
  %v1949 = vsel %vm113, %v1948, %v1947
  %v1950 = vrot.slane %v1931, 3
  %v1951 = vsel %vm116, %v1950, %v1949
  %v1952 = vrot.slane %v1932, 2
  %v1953 = vsel %vm119, %v1952, %v1951
  %v1954 = vrot.slane %v1933, 1
  %v1955 = vsel %vm122, %v1954, %v1953
  %1957 = vmatpush.bf16.msra.mxu0 %v86
  %1958 = vmatpush.bf16.msra.mxu0 %v85
  %1959 = vmatpush.bf16.msra.mxu0 %v84
  %1960 = vmatpush.bf16.msra.mxu0 %v83
  %1961 = vmatpush.bf16.msra.mxu0 %v82
  %1962 = vmatpush.bf16.msra.mxu0 %v81
  %1963 = vmatpush.bf16.msra.mxu0 %v80
  %1964 = vmatpush.bf16.msra.mxu0 %v79
  %1965 = vmatmul.bf16.gmra.mxu0 %v1925
  %v1966 = vpop.f32.mrf.mxu0
  %v1967 = vadd.f32 %v1955, %v1966
  %v1968 = vpop.f32.mrf.mxu0
  %1969 = vdwg.mxu0
  %v1970 = vtanh.pop %v1967
  %s1971 = sadd.s32 %s36, 12
  %v1972 = vstv %s1971
  %vm1973 = vcmp.lt.s32.totalorder %v1972, %v35
  %v1974 = vsel %vm1973, 1, 0
  %1975 = vset.pattern.permute.xlu0 0
  %1976 = vperm.xlu0 %1975, %v1974
  %v1977 = vpop.permute.xlu0 %1976
  %vm1978 = vcmp.eq.s32.totalorder %v1977, 1
  %v1979 = vsel %vm1978, %v1970, 0.0
  %v1980 = vpack.c.bf16 %v1979, %v1979
  %v1982 = vrot.slane %v1980, 3
  %v1985 = vsel %vm150, %v1980, %v1982
  %v1987 = vsel %vm104, %v1980, %v1982
  %v1989 = vrot.slane %v1987, 1
  %v1990 = vsel %vm107, %v1980, %v1982
  %v1992 = vrot.slane %v1990, 2
  %v1993 = vsel %vm110, %v1980, %v1982
  %v1995 = vrot.slane %v1993, 3
  %v1996 = vunpack.i.l.s16 %v1985
  %v1997 = vunpack.i.h.s16 %v1985
  %v1998 = vunpack.i.l.s16 %v1989
  %v1999 = vunpack.i.h.s16 %v1989
  %v2000 = vunpack.i.l.s16 %v1992
  %v2001 = vunpack.i.h.s16 %v1992
  %v2002 = vunpack.i.l.s16 %v1995
  %v2003 = vunpack.i.h.s16 %v1995
  %v2004 = vpack.i.b16 %v1996, %v1996
  %v2005 = vpack.i.b16 %v1997, %v1997
  %v2006 = vpack.i.b16 %v1998, %v1998
  %v2007 = vpack.i.b16 %v1999, %v1999
  %v2008 = vpack.i.b16 %v2000, %v2000
  %v2009 = vpack.i.b16 %v2001, %v2001
  %v2010 = vpack.i.b16 %v2002, %v2002
  %v2011 = vpack.i.b16 %v2003, %v2003
  %v2013 = vunpack.c.l.s4 286326784
  %v2014 = vunpack.c.0.s8 %v2013
  %v2015 = vperm.slane %v2004, %v2014
  %v2017 = vunpack.c.l.s4 286326784
  %v2018 = vunpack.c.0.s8 %v2017
  %v2019 = vperm.slane %v2005, %v2018
  %v2021 = vunpack.c.l.s4 286326784
  %v2022 = vunpack.c.0.s8 %v2021
  %v2023 = vperm.slane %v2006, %v2022
  %v2025 = vunpack.c.l.s4 286326784
  %v2026 = vunpack.c.0.s8 %v2025
  %v2027 = vperm.slane %v2007, %v2026
  %v2029 = vunpack.c.l.s4 286326784
  %v2030 = vunpack.c.0.s8 %v2029
  %v2031 = vperm.slane %v2008, %v2030
  %v2033 = vunpack.c.l.s4 286326784
  %v2034 = vunpack.c.0.s8 %v2033
  %v2035 = vperm.slane %v2009, %v2034
  %v2037 = vunpack.c.l.s4 286326784
  %v2038 = vunpack.c.0.s8 %v2037
  %v2039 = vperm.slane %v2010, %v2038
  %v2041 = vunpack.c.l.s4 286326784
  %v2042 = vunpack.c.0.s8 %v2041
  %v2043 = vperm.slane %v2011, %v2042
  %v2052 = vld [vmem:[%s3 + $0x4] sm:$0x4]
  %v2053 = vsel %vm836, %v2015, %v2052
  %2054 = vst [vmem:[%s3 + $0x4] sm:$0x4] %v2053
  %v2055 = vld [vmem:[%s3 + $0xc] sm:$0x4]
  %v2056 = vsel %vm836, %v2019, %v2055
  %2057 = vst [vmem:[%s3 + $0xc] sm:$0x4] %v2056
  %v2058 = vld [vmem:[%s3 + $0x14] sm:$0x4]
  %v2059 = vsel %vm836, %v2023, %v2058
  %2060 = vst [vmem:[%s3 + $0x14] sm:$0x4] %v2059
  %v2061 = vld [vmem:[%s3 + $0x1c] sm:$0x4]
  %v2062 = vsel %vm836, %v2027, %v2061
  %2063 = vst [vmem:[%s3 + $0x1c] sm:$0x4] %v2062
  %v2064 = vld [vmem:[%s3 + $0x24] sm:$0x4]
  %v2065 = vsel %vm836, %v2031, %v2064
  %2066 = vst [vmem:[%s3 + $0x24] sm:$0x4] %v2065
  %v2067 = vld [vmem:[%s3 + $0x2c] sm:$0x4]
  %v2068 = vsel %vm836, %v2035, %v2067
  %2069 = vst [vmem:[%s3 + $0x2c] sm:$0x4] %v2068
  %v2070 = vld [vmem:[%s3 + $0x34] sm:$0x4]
  %v2071 = vsel %vm836, %v2039, %v2070
  %2072 = vst [vmem:[%s3 + $0x34] sm:$0x4] %v2071
  %v2073 = vld [vmem:[%s3 + $0x3c] sm:$0x4]
  %v2074 = vsel %vm836, %v2043, %v2073
  %2075 = vst [vmem:[%s3 + $0x3c] sm:$0x4] %v2074
  %v2076 = vpack.c.bf16 %v1970, %v1970
  %v2077 = vld [vmem:[%s0 + $0xd] sm:$0x1]
  %v2078 = vld [vmem:[%s0 + $0x1d] sm:$0x1]
  %v2079 = vld [vmem:[%s0 + $0x2d] sm:$0x1]
  %v2080 = vld [vmem:[%s0 + $0x3d] sm:$0x1]
  %v2081 = vld [vmem:[%s0 + $0x4d] sm:$0x1]
  %v2082 = vld [vmem:[%s0 + $0x5d] sm:$0x1]
  %v2083 = vld [vmem:[%s0 + $0x6d] sm:$0x1]
  %v2084 = vld [vmem:[%s0 + $0x7d] sm:$0x1]
  %v2093 = vrot.slane %v2078, 7
  %v2094 = vsel %vm104, %v2093, %v2077
  %v2095 = vrot.slane %v2079, 6
  %v2096 = vsel %vm107, %v2095, %v2094
  %v2097 = vrot.slane %v2080, 5
  %v2098 = vsel %vm110, %v2097, %v2096
  %v2099 = vrot.slane %v2081, 4
  %v2100 = vsel %vm113, %v2099, %v2098
  %v2101 = vrot.slane %v2082, 3
  %v2102 = vsel %vm116, %v2101, %v2100
  %v2103 = vrot.slane %v2083, 2
  %v2104 = vsel %vm119, %v2103, %v2102
  %v2105 = vrot.slane %v2084, 1
  %v2106 = vsel %vm122, %v2105, %v2104
  %2108 = vmatpush.bf16.msra.mxu0 %v86
  %2109 = vmatpush.bf16.msra.mxu0 %v85
  %2110 = vmatpush.bf16.msra.mxu0 %v84
  %2111 = vmatpush.bf16.msra.mxu0 %v83
  %2112 = vmatpush.bf16.msra.mxu0 %v82
  %2113 = vmatpush.bf16.msra.mxu0 %v81
  %2114 = vmatpush.bf16.msra.mxu0 %v80
  %2115 = vmatpush.bf16.msra.mxu0 %v79
  %2116 = vmatmul.bf16.gmra.mxu0 %v2076
  %v2117 = vpop.f32.mrf.mxu0
  %v2118 = vadd.f32 %v2106, %v2117
  %v2119 = vpop.f32.mrf.mxu0
  %2120 = vdwg.mxu0
  %v2121 = vtanh.pop %v2118
  %s2122 = sadd.s32 %s36, 13
  %v2123 = vstv %s2122
  %vm2124 = vcmp.lt.s32.totalorder %v2123, %v35
  %v2125 = vsel %vm2124, 1, 0
  %2126 = vset.pattern.permute.xlu0 0
  %2127 = vperm.xlu0 %2126, %v2125
  %v2128 = vpop.permute.xlu0 %2127
  %vm2129 = vcmp.eq.s32.totalorder %v2128, 1
  %v2130 = vsel %vm2129, %v2121, 0.0
  %v2131 = vpack.c.bf16 %v2130, %v2130
  %v2133 = vrot.slane %v2131, 3
  %v2136 = vsel %vm150, %v2131, %v2133
  %v2138 = vsel %vm104, %v2131, %v2133
  %v2140 = vrot.slane %v2138, 1
  %v2141 = vsel %vm107, %v2131, %v2133
  %v2143 = vrot.slane %v2141, 2
  %v2144 = vsel %vm110, %v2131, %v2133
  %v2146 = vrot.slane %v2144, 3
  %v2147 = vunpack.i.l.s16 %v2136
  %v2148 = vunpack.i.h.s16 %v2136
  %v2149 = vunpack.i.l.s16 %v2140
  %v2150 = vunpack.i.h.s16 %v2140
  %v2151 = vunpack.i.l.s16 %v2143
  %v2152 = vunpack.i.h.s16 %v2143
  %v2153 = vunpack.i.l.s16 %v2146
  %v2154 = vunpack.i.h.s16 %v2146
  %v2155 = vpack.i.b16 %v2147, %v2147
  %v2156 = vpack.i.b16 %v2148, %v2148
  %v2157 = vpack.i.b16 %v2149, %v2149
  %v2158 = vpack.i.b16 %v2150, %v2150
  %v2159 = vpack.i.b16 %v2151, %v2151
  %v2160 = vpack.i.b16 %v2152, %v2152
  %v2161 = vpack.i.b16 %v2153, %v2153
  %v2162 = vpack.i.b16 %v2154, %v2154
  %v2164 = vunpack.c.l.s4 286326784
  %v2165 = vunpack.c.0.s8 %v2164
  %v2166 = vperm.slane %v2155, %v2165
  %v2168 = vunpack.c.l.s4 286326784
  %v2169 = vunpack.c.0.s8 %v2168
  %v2170 = vperm.slane %v2156, %v2169
  %v2172 = vunpack.c.l.s4 286326784
  %v2173 = vunpack.c.0.s8 %v2172
  %v2174 = vperm.slane %v2157, %v2173
  %v2176 = vunpack.c.l.s4 286326784
  %v2177 = vunpack.c.0.s8 %v2176
  %v2178 = vperm.slane %v2158, %v2177
  %v2180 = vunpack.c.l.s4 286326784
  %v2181 = vunpack.c.0.s8 %v2180
  %v2182 = vperm.slane %v2159, %v2181
  %v2184 = vunpack.c.l.s4 286326784
  %v2185 = vunpack.c.0.s8 %v2184
  %v2186 = vperm.slane %v2160, %v2185
  %v2188 = vunpack.c.l.s4 286326784
  %v2189 = vunpack.c.0.s8 %v2188
  %v2190 = vperm.slane %v2161, %v2189
  %v2192 = vunpack.c.l.s4 286326784
  %v2193 = vunpack.c.0.s8 %v2192
  %v2194 = vperm.slane %v2162, %v2193
  %v2203 = vld [vmem:[%s3 + $0x4] sm:$0x4]
  %v2204 = vsel %vm989, %v2166, %v2203
  %2205 = vst [vmem:[%s3 + $0x4] sm:$0x4] %v2204
  %v2206 = vld [vmem:[%s3 + $0xc] sm:$0x4]
  %v2207 = vsel %vm989, %v2170, %v2206
  %2208 = vst [vmem:[%s3 + $0xc] sm:$0x4] %v2207
  %v2209 = vld [vmem:[%s3 + $0x14] sm:$0x4]
  %v2210 = vsel %vm989, %v2174, %v2209
  %2211 = vst [vmem:[%s3 + $0x14] sm:$0x4] %v2210
  %v2212 = vld [vmem:[%s3 + $0x1c] sm:$0x4]
  %v2213 = vsel %vm989, %v2178, %v2212
  %2214 = vst [vmem:[%s3 + $0x1c] sm:$0x4] %v2213
  %v2215 = vld [vmem:[%s3 + $0x24] sm:$0x4]
  %v2216 = vsel %vm989, %v2182, %v2215
  %2217 = vst [vmem:[%s3 + $0x24] sm:$0x4] %v2216
  %v2218 = vld [vmem:[%s3 + $0x2c] sm:$0x4]
  %v2219 = vsel %vm989, %v2186, %v2218
  %2220 = vst [vmem:[%s3 + $0x2c] sm:$0x4] %v2219
  %v2221 = vld [vmem:[%s3 + $0x34] sm:$0x4]
  %v2222 = vsel %vm989, %v2190, %v2221
  %2223 = vst [vmem:[%s3 + $0x34] sm:$0x4] %v2222
  %v2224 = vld [vmem:[%s3 + $0x3c] sm:$0x4]
  %v2225 = vsel %vm989, %v2194, %v2224
  %2226 = vst [vmem:[%s3 + $0x3c] sm:$0x4] %v2225
  %v2227 = vpack.c.bf16 %v2121, %v2121
  %v2228 = vld [vmem:[%s0 + $0xe] sm:$0x1]
  %v2229 = vld [vmem:[%s0 + $0x1e] sm:$0x1]
  %v2230 = vld [vmem:[%s0 + $0x2e] sm:$0x1]
  %v2231 = vld [vmem:[%s0 + $0x3e] sm:$0x1]
  %v2232 = vld [vmem:[%s0 + $0x4e] sm:$0x1]
  %v2233 = vld [vmem:[%s0 + $0x5e] sm:$0x1]
  %v2234 = vld [vmem:[%s0 + $0x6e] sm:$0x1]
  %v2235 = vld [vmem:[%s0 + $0x7e] sm:$0x1]
  %v2244 = vrot.slane %v2229, 7
  %v2245 = vsel %vm104, %v2244, %v2228
  %v2246 = vrot.slane %v2230, 6
  %v2247 = vsel %vm107, %v2246, %v2245
  %v2248 = vrot.slane %v2231, 5
  %v2249 = vsel %vm110, %v2248, %v2247
  %v2250 = vrot.slane %v2232, 4
  %v2251 = vsel %vm113, %v2250, %v2249
  %v2252 = vrot.slane %v2233, 3
  %v2253 = vsel %vm116, %v2252, %v2251
  %v2254 = vrot.slane %v2234, 2
  %v2255 = vsel %vm119, %v2254, %v2253
  %v2256 = vrot.slane %v2235, 1
  %v2257 = vsel %vm122, %v2256, %v2255
  %2259 = vmatpush.bf16.msra.mxu0 %v86
  %2260 = vmatpush.bf16.msra.mxu0 %v85
  %2261 = vmatpush.bf16.msra.mxu0 %v84
  %2262 = vmatpush.bf16.msra.mxu0 %v83
  %2263 = vmatpush.bf16.msra.mxu0 %v82
  %2264 = vmatpush.bf16.msra.mxu0 %v81
  %2265 = vmatpush.bf16.msra.mxu0 %v80
  %2266 = vmatpush.bf16.msra.mxu0 %v79
  %2267 = vmatmul.bf16.gmra.mxu0 %v2227
  %v2268 = vpop.f32.mrf.mxu0
  %v2269 = vadd.f32 %v2257, %v2268
  %v2270 = vpop.f32.mrf.mxu0
  %2271 = vdwg.mxu0
  %v2272 = vtanh.pop %v2269
  %s2273 = sadd.s32 %s36, 14
  %v2274 = vstv %s2273
  %vm2275 = vcmp.lt.s32.totalorder %v2274, %v35
  %v2276 = vsel %vm2275, 1, 0
  %2277 = vset.pattern.permute.xlu0 0
  %2278 = vperm.xlu0 %2277, %v2276
  %v2279 = vpop.permute.xlu0 %2278
  %vm2280 = vcmp.eq.s32.totalorder %v2279, 1
  %v2281 = vsel %vm2280, %v2272, 0.0
  %v2282 = vpack.c.bf16 %v2281, %v2281
  %v2284 = vrot.slane %v2282, 3
  %v2287 = vsel %vm150, %v2282, %v2284
  %v2289 = vsel %vm104, %v2282, %v2284
  %v2291 = vrot.slane %v2289, 1
  %v2292 = vsel %vm107, %v2282, %v2284
  %v2294 = vrot.slane %v2292, 2
  %v2295 = vsel %vm110, %v2282, %v2284
  %v2297 = vrot.slane %v2295, 3
  %v2298 = vunpack.i.l.s16 %v2287
  %v2299 = vunpack.i.h.s16 %v2287
  %v2300 = vunpack.i.l.s16 %v2291
  %v2301 = vunpack.i.h.s16 %v2291
  %v2302 = vunpack.i.l.s16 %v2294
  %v2303 = vunpack.i.h.s16 %v2294
  %v2304 = vunpack.i.l.s16 %v2297
  %v2305 = vunpack.i.h.s16 %v2297
  %v2306 = vpack.i.b16 %v2298, %v2298
  %v2307 = vpack.i.b16 %v2299, %v2299
  %v2308 = vpack.i.b16 %v2300, %v2300
  %v2309 = vpack.i.b16 %v2301, %v2301
  %v2310 = vpack.i.b16 %v2302, %v2302
  %v2311 = vpack.i.b16 %v2303, %v2303
  %v2312 = vpack.i.b16 %v2304, %v2304
  %v2313 = vpack.i.b16 %v2305, %v2305
  %v2315 = vunpack.c.l.s4 286326784
  %v2316 = vunpack.c.0.s8 %v2315
  %v2317 = vperm.slane %v2306, %v2316
  %v2319 = vunpack.c.l.s4 286326784
  %v2320 = vunpack.c.0.s8 %v2319
  %v2321 = vperm.slane %v2307, %v2320
  %v2323 = vunpack.c.l.s4 286326784
  %v2324 = vunpack.c.0.s8 %v2323
  %v2325 = vperm.slane %v2308, %v2324
  %v2327 = vunpack.c.l.s4 286326784
  %v2328 = vunpack.c.0.s8 %v2327
  %v2329 = vperm.slane %v2309, %v2328
  %v2331 = vunpack.c.l.s4 286326784
  %v2332 = vunpack.c.0.s8 %v2331
  %v2333 = vperm.slane %v2310, %v2332
  %v2335 = vunpack.c.l.s4 286326784
  %v2336 = vunpack.c.0.s8 %v2335
  %v2337 = vperm.slane %v2311, %v2336
  %v2339 = vunpack.c.l.s4 286326784
  %v2340 = vunpack.c.0.s8 %v2339
  %v2341 = vperm.slane %v2312, %v2340
  %v2343 = vunpack.c.l.s4 286326784
  %v2344 = vunpack.c.0.s8 %v2343
  %v2345 = vperm.slane %v2313, %v2344
  %v2354 = vld [vmem:[%s3 + $0x4] sm:$0x8]
  %v2355 = vsel %vm1143, %v2317, %v2354
  %2356 = vst [vmem:[%s3 + $0x4] sm:$0x8] %v2355
  %v2357 = vld [vmem:[%s3 + $0xc] sm:$0x8]
  %v2358 = vsel %vm1143, %v2321, %v2357
  %2359 = vst [vmem:[%s3 + $0xc] sm:$0x8] %v2358
  %v2360 = vld [vmem:[%s3 + $0x14] sm:$0x8]
  %v2361 = vsel %vm1143, %v2325, %v2360
  %2362 = vst [vmem:[%s3 + $0x14] sm:$0x8] %v2361
  %v2363 = vld [vmem:[%s3 + $0x1c] sm:$0x8]
  %v2364 = vsel %vm1143, %v2329, %v2363
  %2365 = vst [vmem:[%s3 + $0x1c] sm:$0x8] %v2364
  %v2366 = vld [vmem:[%s3 + $0x24] sm:$0x8]
  %v2367 = vsel %vm1143, %v2333, %v2366
  %2368 = vst [vmem:[%s3 + $0x24] sm:$0x8] %v2367
  %v2369 = vld [vmem:[%s3 + $0x2c] sm:$0x8]
  %v2370 = vsel %vm1143, %v2337, %v2369
  %2371 = vst [vmem:[%s3 + $0x2c] sm:$0x8] %v2370
  %v2372 = vld [vmem:[%s3 + $0x34] sm:$0x8]
  %v2373 = vsel %vm1143, %v2341, %v2372
  %2374 = vst [vmem:[%s3 + $0x34] sm:$0x8] %v2373
  %v2375 = vld [vmem:[%s3 + $0x3c] sm:$0x8]
  %v2376 = vsel %vm1143, %v2345, %v2375
  %2377 = vst [vmem:[%s3 + $0x3c] sm:$0x8] %v2376
  %v2378 = vpack.c.bf16 %v2272, %v2272
  %v2379 = vld [vmem:[%s0 + $0xf] sm:$0x1]
  %v2380 = vld [vmem:[%s0 + $0x1f] sm:$0x1]
  %v2381 = vld [vmem:[%s0 + $0x2f] sm:$0x1]
  %v2382 = vld [vmem:[%s0 + $0x3f] sm:$0x1]
  %v2383 = vld [vmem:[%s0 + $0x4f] sm:$0x1]
  %v2384 = vld [vmem:[%s0 + $0x5f] sm:$0x1]
  %v2385 = vld [vmem:[%s0 + $0x6f] sm:$0x1]
  %v2386 = vld [vmem:[%s0 + $0x7f] sm:$0x1]
  %v2395 = vrot.slane %v2380, 7
  %v2396 = vsel %vm104, %v2395, %v2379
  %v2397 = vrot.slane %v2381, 6
  %v2398 = vsel %vm107, %v2397, %v2396
  %v2399 = vrot.slane %v2382, 5
  %v2400 = vsel %vm110, %v2399, %v2398
  %v2401 = vrot.slane %v2383, 4
  %v2402 = vsel %vm113, %v2401, %v2400
  %v2403 = vrot.slane %v2384, 3
  %v2404 = vsel %vm116, %v2403, %v2402
  %v2405 = vrot.slane %v2385, 2
  %v2406 = vsel %vm119, %v2405, %v2404
  %v2407 = vrot.slane %v2386, 1
  %v2408 = vsel %vm122, %v2407, %v2406
  %2410 = vmatpush.bf16.msra.mxu0 %v86
  %2411 = vmatpush.bf16.msra.mxu0 %v85
  %2412 = vmatpush.bf16.msra.mxu0 %v84
  %2413 = vmatpush.bf16.msra.mxu0 %v83
  %2414 = vmatpush.bf16.msra.mxu0 %v82
  %2415 = vmatpush.bf16.msra.mxu0 %v81
  %2416 = vmatpush.bf16.msra.mxu0 %v80
  %2417 = vmatpush.bf16.msra.mxu0 %v79
  %2418 = vmatmul.bf16.gmra.mxu0 %v2378
  %v2419 = vpop.f32.mrf.mxu0
  %v2420 = vadd.f32 %v2408, %v2419
  %v2421 = vpop.f32.mrf.mxu0
  %2422 = vdwg.mxu0
  %v2423 = vtanh.pop %v2420
  %s2424 = sadd.s32 %s36, 15
  %v2425 = vstv %s2424
  %vm2426 = vcmp.lt.s32.totalorder %v2425, %v35
  %v2427 = vsel %vm2426, 1, 0
  %2428 = vset.pattern.permute.xlu0 0
  %2429 = vperm.xlu0 %2428, %v2427
  %v2430 = vpop.permute.xlu0 %2429
  %vm2431 = vcmp.eq.s32.totalorder %v2430, 1
  %v2432 = vsel %vm2431, %v2423, 0.0
  %v2433 = vpack.c.bf16 %v2432, %v2432
  %v2435 = vrot.slane %v2433, 3
  %v2438 = vsel %vm150, %v2433, %v2435
  %v2440 = vsel %vm104, %v2433, %v2435
  %v2442 = vrot.slane %v2440, 1
  %v2443 = vsel %vm107, %v2433, %v2435
  %v2445 = vrot.slane %v2443, 2
  %v2446 = vsel %vm110, %v2433, %v2435
  %v2448 = vrot.slane %v2446, 3
  %v2449 = vunpack.i.l.s16 %v2438
  %v2450 = vunpack.i.h.s16 %v2438
  %v2451 = vunpack.i.l.s16 %v2442
  %v2452 = vunpack.i.h.s16 %v2442
  %v2453 = vunpack.i.l.s16 %v2445
  %v2454 = vunpack.i.h.s16 %v2445
  %v2455 = vunpack.i.l.s16 %v2448
  %v2456 = vunpack.i.h.s16 %v2448
  %v2457 = vpack.i.b16 %v2449, %v2449
  %v2458 = vpack.i.b16 %v2450, %v2450
  %v2459 = vpack.i.b16 %v2451, %v2451
  %v2460 = vpack.i.b16 %v2452, %v2452
  %v2461 = vpack.i.b16 %v2453, %v2453
  %v2462 = vpack.i.b16 %v2454, %v2454
  %v2463 = vpack.i.b16 %v2455, %v2455
  %v2464 = vpack.i.b16 %v2456, %v2456
  %v2466 = vunpack.c.l.s4 286326784
  %v2467 = vunpack.c.0.s8 %v2466
  %v2468 = vperm.slane %v2457, %v2467
  %v2470 = vunpack.c.l.s4 286326784
  %v2471 = vunpack.c.0.s8 %v2470
  %v2472 = vperm.slane %v2458, %v2471
  %v2474 = vunpack.c.l.s4 286326784
  %v2475 = vunpack.c.0.s8 %v2474
  %v2476 = vperm.slane %v2459, %v2475
  %v2478 = vunpack.c.l.s4 286326784
  %v2479 = vunpack.c.0.s8 %v2478
  %v2480 = vperm.slane %v2460, %v2479
  %v2482 = vunpack.c.l.s4 286326784
  %v2483 = vunpack.c.0.s8 %v2482
  %v2484 = vperm.slane %v2461, %v2483
  %v2486 = vunpack.c.l.s4 286326784
  %v2487 = vunpack.c.0.s8 %v2486
  %v2488 = vperm.slane %v2462, %v2487
  %v2490 = vunpack.c.l.s4 286326784
  %v2491 = vunpack.c.0.s8 %v2490
  %v2492 = vperm.slane %v2463, %v2491
  %v2494 = vunpack.c.l.s4 286326784
  %v2495 = vunpack.c.0.s8 %v2494
  %v2496 = vperm.slane %v2464, %v2495
  %v2505 = vld [vmem:[%s3 + $0x4] sm:$0x8]
  %v2506 = vsel %vm1296, %v2468, %v2505
  %2507 = vst [vmem:[%s3 + $0x4] sm:$0x8] %v2506
  %v2508 = vld [vmem:[%s3 + $0xc] sm:$0x8]
  %v2509 = vsel %vm1296, %v2472, %v2508
  %2510 = vst [vmem:[%s3 + $0xc] sm:$0x8] %v2509
  %v2511 = vld [vmem:[%s3 + $0x14] sm:$0x8]
  %v2512 = vsel %vm1296, %v2476, %v2511
  %2513 = vst [vmem:[%s3 + $0x14] sm:$0x8] %v2512
  %v2514 = vld [vmem:[%s3 + $0x1c] sm:$0x8]
  %v2515 = vsel %vm1296, %v2480, %v2514
  %2516 = vst [vmem:[%s3 + $0x1c] sm:$0x8] %v2515
  %v2517 = vld [vmem:[%s3 + $0x24] sm:$0x8]
  %v2518 = vsel %vm1296, %v2484, %v2517
  %2519 = vst [vmem:[%s3 + $0x24] sm:$0x8] %v2518
  %v2520 = vld [vmem:[%s3 + $0x2c] sm:$0x8]
  %v2521 = vsel %vm1296, %v2488, %v2520
  %2522 = vst [vmem:[%s3 + $0x2c] sm:$0x8] %v2521
  %v2523 = vld [vmem:[%s3 + $0x34] sm:$0x8]
  %v2524 = vsel %vm1296, %v2492, %v2523
  %2525 = vst [vmem:[%s3 + $0x34] sm:$0x8] %v2524
  %v2526 = vld [vmem:[%s3 + $0x3c] sm:$0x8]
  %v2527 = vsel %vm1296, %v2496, %v2526
  %2528 = vst [vmem:[%s3 + $0x3c] sm:$0x8] %v2527
  %2529 = vst [vmem:[#allocation2] sm:$0xff] %v2423
  // Predicated region
  $region18: #{_forward_padded.4} parent=0 // pred_check
    _
  $region19: #{_forward_padded.4} parent=0 // pred_check_branch
    %2531 = sbr.rel (0) target = $region21
  $region20: #{_forward_padded.4} parent=0 // pred_region
    _
  $region21: #{_forward_padded.4} parent=0 // pred_fallthru
    _
  // Predicated region
  $region22: #{_forward_padded.4} parent=0 // pred_check
    _
  $region23: #{_forward_padded.4} parent=0 // pred_check_branch
    %2533 = sbr.rel (0) target = $region25
  $region24: #{_forward_padded.4} parent=0 // pred_region
    _
  $region25: #{_forward_padded.4} parent=0 // pred_fallthru
    _

</llo_original>
